<compile_context>
chip_gen: v5e
topology: v5e:2x2
jax: 0.10.0
libtpu: 0.0.40
codegen_flags: <defaults>
</compile_context>

<pallas_src>
import math
import numpy as np
import jax
import jax.numpy as jnp
from jax import lax
from jax.experimental import pallas as pl
from jax.experimental.pallas import tpu as pltpu

# ----------------------------- model configuration --------------------------
IN_CH = 4          # input_channels
OUT_CH = 8         # output_channels (channel width inside the UNet)
MAX_DEPTH = 5      # module default
LEAKY_SLOPE = 0.2  # LeakyReLU(negative_slope=0.2)
BN_EPS = 1e-5

N_K3 = 2 + MAX_DEPTH        # pre1, pre2, conv2[0..4]   (kernel=3, stride=1, pad=1)
N_K4 = MAX_DEPTH            # conv1[0..4]               (kernel=4, stride=2, pad=1)
N_CONV = N_K3 + N_K4        # 12 folded convs
MAX_TAPS = 4

# Packed slot order: 0=pre1, 1=pre2, 2..6=conv1[0..4] (down), 7..11=conv2[0..4] (up)
SLOT_PRE = 0
SLOT_DOWN = 2
SLOT_UP = 2 + MAX_DEPTH


# ------------------------------- Pallas kernel -------------------------------

def unet1d_kernel(x_ref, w_ref, b_ref, out_ref):
    """Full UNet1D forward, both batch elements in one shot.

    Layout: activations are (B*channels, L): channel rows (sublanes) are
    batch-major, the spatial axis lives on the L lanes.  Downsampled depth-d
    activations keep full lane width; the valid signal sits on lanes
    p % 2**d == 0, the remaining lanes hold don't-care values that are never
    read by a valid lane (all shifts at depth d are multiples of 2**d).

    x_ref  : (B*C_in, L)                  input (batch-major channel rows)
    w_ref  : (N_CONV, B*C, MAX_TAPS*B*C)  BN-folded, batch-block-diagonal, bf16
    b_ref  : (N_CONV, B*C, 1)             BN-folded biases, f32
    out_ref: (B*C, L)
    """
    L = x_ref.shape[-1]

    def read_shift(a, s):
        # copy[:, p] = a[:, p + s] for 0 <= p + s < L, else 0 (conv zero padding).
        if s == 0:
            return a
        rolled = pltpu.roll(a, (-s) % L, axis=1)            # XLU rotate (free slot)
        lane = lax.broadcasted_iota(jnp.int32, a.shape, 1)  # built at point of use
        keep = (lane < L - s) if s > 0 else (lane >= -s)
        return jnp.where(keep, rolled, 0.0)

    def conv(a, slot, ktaps, s):
        # ConvNormRelu (BN folded): im2col along channel rows -> ONE bf16 MXU
        # matmul with f32 accumulation -> bias -> LeakyReLU(0.2).
        rows = a.shape[0]
        cols = jnp.concatenate(
            [read_shift(a, (k - 1) * s) for k in range(ktaps)],
            axis=0).astype(jnp.bfloat16)                    # (ktaps*rows, L)
        y = jnp.dot(w_ref[slot, :, :ktaps * rows], cols,
                    preferred_element_type=jnp.float32) + b_ref[slot]
        return jnp.maximum(y, LEAKY_SLOPE * y)

    a = x_ref[...]                                          # (B*C_in, L)

    # pre_downsampling_conv: two k=3 / s=1 convs at full resolution.
    a = conv(a, SLOT_PRE, 3, 1)
    a = conv(a, SLOT_PRE + 1, 3, 1)

    # encoder: k=4 / stride-2 convs; output of depth d is valid on lanes
    # p % 2**(d+1) == 0 (taps read x[2l-1 .. 2l+2] => shifts -s, 0, s, 2s).
    residuals = [a]
    for d in range(MAX_DEPTH):
        a = conv(a, SLOT_DOWN + d, 4, 1 << d)
        if d < MAX_DEPTH - 1:
            residuals.append(a)

    # decoder: nearest x2 upsample + skip connection, then k=3 conv.
    for i in range(MAX_DEPTH):
        d = MAX_DEPTH - 1 - i          # target depth after upsampling
        s = 1 << d                     # lane spacing at the target depth
        lane = lax.broadcasted_iota(jnp.int32, a.shape, 1)
        a = jnp.where((lane & (2 * s - 1)) == 0, a, pltpu.roll(a, s, axis=1))
        a = a + residuals[d]
        a = conv(a, SLOT_UP + i, 3, s)

    out_ref[...] = a.astype(out_ref.dtype)


# ------------------------------ pallas_call wrapper ---------------------------

def unet1d_forward(x_bcl, w_all, b_all):
    """x_bcl: (B, C_in, L) -> (B, OUT_CH, L), like UNet1D.forward (eval mode)."""
    B, cin, L = x_bcl.shape
    assert L % (1 << MAX_DEPTH) == 0, f"L={L} must be a multiple of {1 << MAX_DEPTH}"
    assert w_all.shape[1] == B * OUT_CH, "weights were packed for a different batch size"

    x2 = x_bcl.reshape(B * cin, L)     # leading-dim collapse: free, no data movement
    out2 = pl.pallas_call(
        unet1d_kernel,
        out_shape=jax.ShapeDtypeStruct((B * OUT_CH, L), jnp.float32),
        grid=(1,),
        in_specs=[
            pl.BlockSpec((B * cin, L), lambda i: (0, 0)),
            pl.BlockSpec(w_all.shape, lambda i: (0, 0, 0)),
            pl.BlockSpec(b_all.shape, lambda i: (0, 0, 0)),
        ],
        out_specs=pl.BlockSpec((B * OUT_CH, L), lambda i: (0, 0)),
        compiler_params=pltpu.CompilerParams(dimension_semantics=("arbitrary",)),
    )(x2, w_all, b_all)
    return out2.reshape(B, OUT_CH, L)


# --------------------------- host-side params & folding -----------------------

def init_params(key):
    """Synthetic Conv1d + BatchNorm1d parameters for every ConvNormRelu block."""
    specs = ([(IN_CH, OUT_CH, 3), (OUT_CH, OUT_CH, 3)]
             + [(OUT_CH, OUT_CH, 4)] * MAX_DEPTH
             + [(OUT_CH, OUT_CH, 3)] * MAX_DEPTH)
    keys = iter(jax.random.split(key, len(specs) * 6))
    convs = []
    for cin, cout, k in specs:
        fan_in = cin * k
        convs.append(dict(
            W=jax.random.normal(next(keys), (cout, cin, k), jnp.float32) / math.sqrt(fan_in),
            b=0.1 * jax.random.normal(next(keys), (cout,), jnp.float32),
            gamma=0.5 + jax.random.uniform(next(keys), (cout,), jnp.float32),
            beta=0.1 * jax.random.normal(next(keys), (cout,), jnp.float32),
            mean=0.1 * jax.random.normal(next(keys), (cout,), jnp.float32),
            var=0.5 + jax.random.uniform(next(keys), (cout,), jnp.float32),
        ))
    return convs


def pack_folded(convs, batch=2):
    """Fold eval-mode BatchNorm into the convs; pack as batch-block-diagonal
    im2col weights (bf16) + biases (f32):
        w_all[i, b*Cout+co, t*batch*Cin + b*Cin + ci] = (W*scale)[co, ci, t]
    """
    rows = batch * OUT_CH
    w_all = np.zeros((N_CONV, rows, MAX_TAPS * rows), np.float32)
    b_all = np.zeros((N_CONV, rows, 1), np.float32)
    for i, c in enumerate(convs):
        W = np.asarray(c["W"])          # (Cout, Cin, K) PyTorch layout
        b = np.asarray(c["b"])
        scale = np.asarray(c["gamma"]) / np.sqrt(np.asarray(c["var"]) + BN_EPS)
        Wf = W * scale[:, None, None]
        bf = (b - np.asarray(c["mean"])) * scale + np.asarray(c["beta"])
        cout, cin, k = Wf.shape
        for t in range(k):
            for bb in range(batch):
                r0 = bb * cout
                c0 = t * batch * cin + bb * cin
                w_all[i, r0:r0 + cout, c0:c0 + cin] = Wf[:, :, t]
        for bb in range(batch):
            b_all[i, bb * cout:(bb + 1) * cout, 0] = bf
    return jnp.asarray(w_all, jnp.bfloat16), jnp.asarray(b_all, jnp.float32)


# ------------------------------ pure-JAX reference ----------------------------

def _ref_forward(x, convs):
    """Reference UNet1D forward using lax.conv + unfolded BatchNorm (eval mode)."""
    def cnr(x, p, stride):
        W, b = p["W"], p["b"]
        pad = (W.shape[-1] - stride) // 2
        y = lax.conv_general_dilated(
            x, W, window_strides=(stride,), padding=[(pad, pad)],
            dimension_numbers=("NCH", "OIH", "NCH"))
        y = y + b[None, :, None]
        scale = p["gamma"] / jnp.sqrt(p["var"] + BN_EPS)
        y = (y - p["mean"][None, :, None]) * scale[None, :, None] + p["beta"][None, :, None]
        return jnp.where(y > 0, y, LEAKY_SLOPE * y)

    x = cnr(x, convs[0], 1)
    x = cnr(x, convs[1], 1)
    residuals = [x]
    for i in range(MAX_DEPTH):
        x = cnr(x, convs[SLOT_DOWN + i], 2)
        if i < MAX_DEPTH - 1:
            residuals.append(x)
    for i in range(MAX_DEPTH):
        x = jnp.repeat(x, 2, axis=-1) + residuals[MAX_DEPTH - 1 - i]
        x = cnr(x, convs[SLOT_UP + i], 1)
    return x


# ------------------------------------ main ------------------------------------

if __name__ == "__main__":
    B, L = 2, 64                      # L must be a multiple of 2**MAX_DEPTH
    key = jax.random.PRNGKey(0)
    kx, kp = jax.random.split(key)
    x = jax.random.normal(kx, (B, IN_CH, L), jnp.float32)

    convs = init_params(kp)
    w_all, b_all = pack_folded(convs, batch=B)

    fwd = jax.jit(unet1d_forward)
    out = jax.block_until_ready(fwd(x, w_all, b_all))
    assert out.shape == (B, OUT_CH, L), out.shape

    ref = _ref_forward(x, convs)
    np.testing.assert_allclose(np.asarray(out), np.asarray(ref), rtol=5e-2, atol=5e-2)

    print("KERNEL_OK")
</pallas_src>

<mosaic_0001>
module attributes {stable_mosaic.version = 11 : i64} {
  func.func @unet1d_kernel(%arg0: i32, %arg1: memref<8x64xf32, #tpu.memory_space<vmem>>, %arg2: memref<12x16x64xbf16, #tpu.memory_space<vmem>>, %arg3: memref<12x16x1xf32, #tpu.memory_space<vmem>>, %arg4: memref<16x64xf32, #tpu.memory_space<vmem>>) attributes {dimension_semantics = [#tpu.dimension_semantics<arbitrary>], iteration_bounds = array<i64: 1>, scalar_prefetch = 0 : i64, scratch_operands = 0 : i64, tpu.core_type = #tpu.core_type<tc>, window_params = [{pipeline_mode = #tpu.pipeline_mode<synchronous>, transform_indices = @transform_0, window_bounds = array<i64: 8, 64>}, {pipeline_mode = #tpu.pipeline_mode<synchronous>, transform_indices = @transform_1, window_bounds = array<i64: 12, 16, 64>}, {pipeline_mode = #tpu.pipeline_mode<synchronous>, transform_indices = @transform_2, window_bounds = array<i64: 12, 16, 1>}, {pipeline_mode = #tpu.pipeline_mode<synchronous>, transform_indices = @transform_3, window_bounds = array<i64: 16, 64>}]} {
    %c0 = arith.constant 0 : index
    %c0_0 = arith.constant 0 : index
    %0 = vector.load %arg1[%c0, %c0_0] : memref<8x64xf32, #tpu.memory_space<vmem>>, vector<8x64xf32>
    %c1_i32 = arith.constant 1 : i32
    %1 = tpu.dynamic_rotate %0 by %c1_i32 dim 1 : vector<8x64xf32>, i32 -> vector<8x64xf32>
    %2 = tpu.iota {dimensions = array<i32: 1>} : vector<8x64xi32>
    %c1_i32_1 = arith.constant 1 : i32
    %3 = vector.broadcast %c1_i32_1 : i32 to vector<8x64xi32>
    %4 = arith.cmpi sge, %2, %3 : vector<8x64xi32>
    %cst = arith.constant 0.000000e+00 : f32
    %5 = vector.broadcast %cst : f32 to vector<8x64xf32>
    %6 = arith.select %4, %1, %5 : vector<8x64xi1>, vector<8x64xf32>
    %c63_i32 = arith.constant 63 : i32
    %7 = tpu.dynamic_rotate %0 by %c63_i32 dim 1 : vector<8x64xf32>, i32 -> vector<8x64xf32>
    %8 = tpu.iota {dimensions = array<i32: 1>} : vector<8x64xi32>
    %c63_i32_2 = arith.constant 63 : i32
    %9 = vector.broadcast %c63_i32_2 : i32 to vector<8x64xi32>
    %10 = arith.cmpi slt, %8, %9 : vector<8x64xi32>
    %cst_3 = arith.constant 0.000000e+00 : f32
    %11 = vector.broadcast %cst_3 : f32 to vector<8x64xf32>
    %12 = arith.select %10, %7, %11 : vector<8x64xi1>, vector<8x64xf32>
    %13 = tpu.concatenate %6, %0, %12 in 0 : vector<8x64xf32>, vector<8x64xf32>, vector<8x64xf32> -> vector<24x64xf32>
    %14 = arith.truncf %13 : vector<24x64xf32> to vector<24x64xbf16>
    %c0_4 = arith.constant 0 : index
    %c0_5 = arith.constant 0 : index
    %c0_6 = arith.constant 0 : index
    %15 = vector.load %arg2[%c0_4, %c0_5, %c0_6] : memref<12x16x64xbf16, #tpu.memory_space<vmem>>, vector<1x16x24xbf16>
    %16 = vector.shape_cast %15 : vector<1x16x24xbf16> to vector<16x24xbf16>
    %cst_7 = arith.constant dense<0.000000e+00> : vector<16x64xf32>
    %17 = tpu.matmul %16, %14, %cst_7 {dimension_numbers = #tpu.dot_dimension_numbers<[1], [0], [0], [1], [0, 0, 1, 1], [], []>} : vector<16x24xbf16>, vector<24x64xbf16>, vector<16x64xf32> -> vector<16x64xf32>
    %c0_8 = arith.constant 0 : index
    %c0_9 = arith.constant 0 : index
    %c0_10 = arith.constant 0 : index
    %18 = vector.load %arg3[%c0_8, %c0_9, %c0_10] : memref<12x16x1xf32, #tpu.memory_space<vmem>>, vector<1x16x1xf32>
    %19 = vector.shape_cast %18 : vector<1x16x1xf32> to vector<16x1xf32>
    %20 = vector.broadcast %19 : vector<16x1xf32> to vector<16x64xf32>
    %21 = arith.addf %17, %20 : vector<16x64xf32>
    %cst_11 = arith.constant 2.000000e-01 : f32
    %22 = vector.broadcast %cst_11 : f32 to vector<16x64xf32>
    %23 = arith.mulf %22, %21 : vector<16x64xf32>
    %24 = arith.maximumf %21, %23 : vector<16x64xf32>
    %c1_i32_12 = arith.constant 1 : i32
    %25 = tpu.dynamic_rotate %24 by %c1_i32_12 dim 1 : vector<16x64xf32>, i32 -> vector<16x64xf32>
    %26 = tpu.iota {dimensions = array<i32: 1>} : vector<16x64xi32>
    %c1_i32_13 = arith.constant 1 : i32
    %27 = vector.broadcast %c1_i32_13 : i32 to vector<16x64xi32>
    %28 = arith.cmpi sge, %26, %27 : vector<16x64xi32>
    %cst_14 = arith.constant 0.000000e+00 : f32
    %29 = vector.broadcast %cst_14 : f32 to vector<16x64xf32>
    %30 = arith.select %28, %25, %29 : vector<16x64xi1>, vector<16x64xf32>
    %c63_i32_15 = arith.constant 63 : i32
    %31 = tpu.dynamic_rotate %24 by %c63_i32_15 dim 1 : vector<16x64xf32>, i32 -> vector<16x64xf32>
    %32 = tpu.iota {dimensions = array<i32: 1>} : vector<16x64xi32>
    %c63_i32_16 = arith.constant 63 : i32
    %33 = vector.broadcast %c63_i32_16 : i32 to vector<16x64xi32>
    %34 = arith.cmpi slt, %32, %33 : vector<16x64xi32>
    %cst_17 = arith.constant 0.000000e+00 : f32
    %35 = vector.broadcast %cst_17 : f32 to vector<16x64xf32>
    %36 = arith.select %34, %31, %35 : vector<16x64xi1>, vector<16x64xf32>
    %37 = tpu.concatenate %30, %24, %36 in 0 : vector<16x64xf32>, vector<16x64xf32>, vector<16x64xf32> -> vector<48x64xf32>
    %38 = arith.truncf %37 : vector<48x64xf32> to vector<48x64xbf16>
    %c1 = arith.constant 1 : index
    %c0_18 = arith.constant 0 : index
    %c0_19 = arith.constant 0 : index
    %39 = vector.load %arg2[%c1, %c0_18, %c0_19] : memref<12x16x64xbf16, #tpu.memory_space<vmem>>, vector<1x16x48xbf16>
    %40 = vector.shape_cast %39 : vector<1x16x48xbf16> to vector<16x48xbf16>
    %cst_20 = arith.constant dense<0.000000e+00> : vector<16x64xf32>
    %41 = tpu.matmul %40, %38, %cst_20 {dimension_numbers = #tpu.dot_dimension_numbers<[1], [0], [0], [1], [0, 0, 1, 1], [], []>} : vector<16x48xbf16>, vector<48x64xbf16>, vector<16x64xf32> -> vector<16x64xf32>
    %c1_21 = arith.constant 1 : index
    %c0_22 = arith.constant 0 : index
    %c0_23 = arith.constant 0 : index
    %42 = vector.load %arg3[%c1_21, %c0_22, %c0_23] : memref<12x16x1xf32, #tpu.memory_space<vmem>>, vector<1x16x1xf32>
    %43 = vector.shape_cast %42 : vector<1x16x1xf32> to vector<16x1xf32>
    %44 = vector.broadcast %43 : vector<16x1xf32> to vector<16x64xf32>
    %45 = arith.addf %41, %44 : vector<16x64xf32>
    %cst_24 = arith.constant 2.000000e-01 : f32
    %46 = vector.broadcast %cst_24 : f32 to vector<16x64xf32>
    %47 = arith.mulf %46, %45 : vector<16x64xf32>
    %48 = arith.maximumf %45, %47 : vector<16x64xf32>
    %c1_i32_25 = arith.constant 1 : i32
    %49 = tpu.dynamic_rotate %48 by %c1_i32_25 dim 1 : vector<16x64xf32>, i32 -> vector<16x64xf32>
    %50 = tpu.iota {dimensions = array<i32: 1>} : vector<16x64xi32>
    %c1_i32_26 = arith.constant 1 : i32
    %51 = vector.broadcast %c1_i32_26 : i32 to vector<16x64xi32>
    %52 = arith.cmpi sge, %50, %51 : vector<16x64xi32>
    %cst_27 = arith.constant 0.000000e+00 : f32
    %53 = vector.broadcast %cst_27 : f32 to vector<16x64xf32>
    %54 = arith.select %52, %49, %53 : vector<16x64xi1>, vector<16x64xf32>
    %c63_i32_28 = arith.constant 63 : i32
    %55 = tpu.dynamic_rotate %48 by %c63_i32_28 dim 1 : vector<16x64xf32>, i32 -> vector<16x64xf32>
    %56 = tpu.iota {dimensions = array<i32: 1>} : vector<16x64xi32>
    %c63_i32_29 = arith.constant 63 : i32
    %57 = vector.broadcast %c63_i32_29 : i32 to vector<16x64xi32>
    %58 = arith.cmpi slt, %56, %57 : vector<16x64xi32>
    %cst_30 = arith.constant 0.000000e+00 : f32
    %59 = vector.broadcast %cst_30 : f32 to vector<16x64xf32>
    %60 = arith.select %58, %55, %59 : vector<16x64xi1>, vector<16x64xf32>
    %c62_i32 = arith.constant 62 : i32
    %61 = tpu.dynamic_rotate %48 by %c62_i32 dim 1 : vector<16x64xf32>, i32 -> vector<16x64xf32>
    %62 = tpu.iota {dimensions = array<i32: 1>} : vector<16x64xi32>
    %c62_i32_31 = arith.constant 62 : i32
    %63 = vector.broadcast %c62_i32_31 : i32 to vector<16x64xi32>
    %64 = arith.cmpi slt, %62, %63 : vector<16x64xi32>
    %cst_32 = arith.constant 0.000000e+00 : f32
    %65 = vector.broadcast %cst_32 : f32 to vector<16x64xf32>
    %66 = arith.select %64, %61, %65 : vector<16x64xi1>, vector<16x64xf32>
    %67 = tpu.concatenate %54, %48, %60, %66 in 0 : vector<16x64xf32>, vector<16x64xf32>, vector<16x64xf32>, vector<16x64xf32> -> vector<64x64xf32>
    %68 = arith.truncf %67 : vector<64x64xf32> to vector<64x64xbf16>
    %c2 = arith.constant 2 : index
    %c0_33 = arith.constant 0 : index
    %c0_34 = arith.constant 0 : index
    %69 = vector.load %arg2[%c2, %c0_33, %c0_34] : memref<12x16x64xbf16, #tpu.memory_space<vmem>>, vector<1x16x64xbf16>
    %70 = vector.shape_cast %69 : vector<1x16x64xbf16> to vector<16x64xbf16>
    %cst_35 = arith.constant dense<0.000000e+00> : vector<16x64xf32>
    %71 = tpu.matmul %70, %68, %cst_35 {dimension_numbers = #tpu.dot_dimension_numbers<[1], [0], [0], [1], [0, 0, 1, 1], [], []>} : vector<16x64xbf16>, vector<64x64xbf16>, vector<16x64xf32> -> vector<16x64xf32>
    %c2_36 = arith.constant 2 : index
    %c0_37 = arith.constant 0 : index
    %c0_38 = arith.constant 0 : index
    %72 = vector.load %arg3[%c2_36, %c0_37, %c0_38] : memref<12x16x1xf32, #tpu.memory_space<vmem>>, vector<1x16x1xf32>
    %73 = vector.shape_cast %72 : vector<1x16x1xf32> to vector<16x1xf32>
    %74 = vector.broadcast %73 : vector<16x1xf32> to vector<16x64xf32>
    %75 = arith.addf %71, %74 : vector<16x64xf32>
    %cst_39 = arith.constant 2.000000e-01 : f32
    %76 = vector.broadcast %cst_39 : f32 to vector<16x64xf32>
    %77 = arith.mulf %76, %75 : vector<16x64xf32>
    %78 = arith.maximumf %75, %77 : vector<16x64xf32>
    %c2_i32 = arith.constant 2 : i32
    %79 = tpu.dynamic_rotate %78 by %c2_i32 dim 1 : vector<16x64xf32>, i32 -> vector<16x64xf32>
    %80 = tpu.iota {dimensions = array<i32: 1>} : vector<16x64xi32>
    %c2_i32_40 = arith.constant 2 : i32
    %81 = vector.broadcast %c2_i32_40 : i32 to vector<16x64xi32>
    %82 = arith.cmpi sge, %80, %81 : vector<16x64xi32>
    %cst_41 = arith.constant 0.000000e+00 : f32
    %83 = vector.broadcast %cst_41 : f32 to vector<16x64xf32>
    %84 = arith.select %82, %79, %83 : vector<16x64xi1>, vector<16x64xf32>
    %c62_i32_42 = arith.constant 62 : i32
    %85 = tpu.dynamic_rotate %78 by %c62_i32_42 dim 1 : vector<16x64xf32>, i32 -> vector<16x64xf32>
    %86 = tpu.iota {dimensions = array<i32: 1>} : vector<16x64xi32>
    %c62_i32_43 = arith.constant 62 : i32
    %87 = vector.broadcast %c62_i32_43 : i32 to vector<16x64xi32>
    %88 = arith.cmpi slt, %86, %87 : vector<16x64xi32>
    %cst_44 = arith.constant 0.000000e+00 : f32
    %89 = vector.broadcast %cst_44 : f32 to vector<16x64xf32>
    %90 = arith.select %88, %85, %89 : vector<16x64xi1>, vector<16x64xf32>
    %c60_i32 = arith.constant 60 : i32
    %91 = tpu.dynamic_rotate %78 by %c60_i32 dim 1 : vector<16x64xf32>, i32 -> vector<16x64xf32>
    %92 = tpu.iota {dimensions = array<i32: 1>} : vector<16x64xi32>
    %c60_i32_45 = arith.constant 60 : i32
    %93 = vector.broadcast %c60_i32_45 : i32 to vector<16x64xi32>
    %94 = arith.cmpi slt, %92, %93 : vector<16x64xi32>
    %cst_46 = arith.constant 0.000000e+00 : f32
    %95 = vector.broadcast %cst_46 : f32 to vector<16x64xf32>
    %96 = arith.select %94, %91, %95 : vector<16x64xi1>, vector<16x64xf32>
    %97 = tpu.concatenate %84, %78, %90, %96 in 0 : vector<16x64xf32>, vector<16x64xf32>, vector<16x64xf32>, vector<16x64xf32> -> vector<64x64xf32>
    %98 = arith.truncf %97 : vector<64x64xf32> to vector<64x64xbf16>
    %c3 = arith.constant 3 : index
    %c0_47 = arith.constant 0 : index
    %c0_48 = arith.constant 0 : index
    %99 = vector.load %arg2[%c3, %c0_47, %c0_48] : memref<12x16x64xbf16, #tpu.memory_space<vmem>>, vector<1x16x64xbf16>
    %100 = vector.shape_cast %99 : vector<1x16x64xbf16> to vector<16x64xbf16>
    %cst_49 = arith.constant dense<0.000000e+00> : vector<16x64xf32>
    %101 = tpu.matmul %100, %98, %cst_49 {dimension_numbers = #tpu.dot_dimension_numbers<[1], [0], [0], [1], [0, 0, 1, 1], [], []>} : vector<16x64xbf16>, vector<64x64xbf16>, vector<16x64xf32> -> vector<16x64xf32>
    %c3_50 = arith.constant 3 : index
    %c0_51 = arith.constant 0 : index
    %c0_52 = arith.constant 0 : index
    %102 = vector.load %arg3[%c3_50, %c0_51, %c0_52] : memref<12x16x1xf32, #tpu.memory_space<vmem>>, vector<1x16x1xf32>
    %103 = vector.shape_cast %102 : vector<1x16x1xf32> to vector<16x1xf32>
    %104 = vector.broadcast %103 : vector<16x1xf32> to vector<16x64xf32>
    %105 = arith.addf %101, %104 : vector<16x64xf32>
    %cst_53 = arith.constant 2.000000e-01 : f32
    %106 = vector.broadcast %cst_53 : f32 to vector<16x64xf32>
    %107 = arith.mulf %106, %105 : vector<16x64xf32>
    %108 = arith.maximumf %105, %107 : vector<16x64xf32>
    %c4_i32 = arith.constant 4 : i32
    %109 = tpu.dynamic_rotate %108 by %c4_i32 dim 1 : vector<16x64xf32>, i32 -> vector<16x64xf32>
    %110 = tpu.iota {dimensions = array<i32: 1>} : vector<16x64xi32>
    %c4_i32_54 = arith.constant 4 : i32
    %111 = vector.broadcast %c4_i32_54 : i32 to vector<16x64xi32>
    %112 = arith.cmpi sge, %110, %111 : vector<16x64xi32>
    %cst_55 = arith.constant 0.000000e+00 : f32
    %113 = vector.broadcast %cst_55 : f32 to vector<16x64xf32>
    %114 = arith.select %112, %109, %113 : vector<16x64xi1>, vector<16x64xf32>
    %c60_i32_56 = arith.constant 60 : i32
    %115 = tpu.dynamic_rotate %108 by %c60_i32_56 dim 1 : vector<16x64xf32>, i32 -> vector<16x64xf32>
    %116 = tpu.iota {dimensions = array<i32: 1>} : vector<16x64xi32>
    %c60_i32_57 = arith.constant 60 : i32
    %117 = vector.broadcast %c60_i32_57 : i32 to vector<16x64xi32>
    %118 = arith.cmpi slt, %116, %117 : vector<16x64xi32>
    %cst_58 = arith.constant 0.000000e+00 : f32
    %119 = vector.broadcast %cst_58 : f32 to vector<16x64xf32>
    %120 = arith.select %118, %115, %119 : vector<16x64xi1>, vector<16x64xf32>
    %c56_i32 = arith.constant 56 : i32
    %121 = tpu.dynamic_rotate %108 by %c56_i32 dim 1 : vector<16x64xf32>, i32 -> vector<16x64xf32>
    %122 = tpu.iota {dimensions = array<i32: 1>} : vector<16x64xi32>
    %c56_i32_59 = arith.constant 56 : i32
    %123 = vector.broadcast %c56_i32_59 : i32 to vector<16x64xi32>
    %124 = arith.cmpi slt, %122, %123 : vector<16x64xi32>
    %cst_60 = arith.constant 0.000000e+00 : f32
    %125 = vector.broadcast %cst_60 : f32 to vector<16x64xf32>
    %126 = arith.select %124, %121, %125 : vector<16x64xi1>, vector<16x64xf32>
    %127 = tpu.concatenate %114, %108, %120, %126 in 0 : vector<16x64xf32>, vector<16x64xf32>, vector<16x64xf32>, vector<16x64xf32> -> vector<64x64xf32>
    %128 = arith.truncf %127 : vector<64x64xf32> to vector<64x64xbf16>
    %c4 = arith.constant 4 : index
    %c0_61 = arith.constant 0 : index
    %c0_62 = arith.constant 0 : index
    %129 = vector.load %arg2[%c4, %c0_61, %c0_62] : memref<12x16x64xbf16, #tpu.memory_space<vmem>>, vector<1x16x64xbf16>
    %130 = vector.shape_cast %129 : vector<1x16x64xbf16> to vector<16x64xbf16>
    %cst_63 = arith.constant dense<0.000000e+00> : vector<16x64xf32>
    %131 = tpu.matmul %130, %128, %cst_63 {dimension_numbers = #tpu.dot_dimension_numbers<[1], [0], [0], [1], [0, 0, 1, 1], [], []>} : vector<16x64xbf16>, vector<64x64xbf16>, vector<16x64xf32> -> vector<16x64xf32>
    %c4_64 = arith.constant 4 : index
    %c0_65 = arith.constant 0 : index
    %c0_66 = arith.constant 0 : index
    %132 = vector.load %arg3[%c4_64, %c0_65, %c0_66] : memref<12x16x1xf32, #tpu.memory_space<vmem>>, vector<1x16x1xf32>
    %133 = vector.shape_cast %132 : vector<1x16x1xf32> to vector<16x1xf32>
    %134 = vector.broadcast %133 : vector<16x1xf32> to vector<16x64xf32>
    %135 = arith.addf %131, %134 : vector<16x64xf32>
    %cst_67 = arith.constant 2.000000e-01 : f32
    %136 = vector.broadcast %cst_67 : f32 to vector<16x64xf32>
    %137 = arith.mulf %136, %135 : vector<16x64xf32>
    %138 = arith.maximumf %135, %137 : vector<16x64xf32>
    %c8_i32 = arith.constant 8 : i32
    %139 = tpu.dynamic_rotate %138 by %c8_i32 dim 1 : vector<16x64xf32>, i32 -> vector<16x64xf32>
    %140 = tpu.iota {dimensions = array<i32: 1>} : vector<16x64xi32>
    %c8_i32_68 = arith.constant 8 : i32
    %141 = vector.broadcast %c8_i32_68 : i32 to vector<16x64xi32>
    %142 = arith.cmpi sge, %140, %141 : vector<16x64xi32>
    %cst_69 = arith.constant 0.000000e+00 : f32
    %143 = vector.broadcast %cst_69 : f32 to vector<16x64xf32>
    %144 = arith.select %142, %139, %143 : vector<16x64xi1>, vector<16x64xf32>
    %c56_i32_70 = arith.constant 56 : i32
    %145 = tpu.dynamic_rotate %138 by %c56_i32_70 dim 1 : vector<16x64xf32>, i32 -> vector<16x64xf32>
    %146 = tpu.iota {dimensions = array<i32: 1>} : vector<16x64xi32>
    %c56_i32_71 = arith.constant 56 : i32
    %147 = vector.broadcast %c56_i32_71 : i32 to vector<16x64xi32>
    %148 = arith.cmpi slt, %146, %147 : vector<16x64xi32>
    %cst_72 = arith.constant 0.000000e+00 : f32
    %149 = vector.broadcast %cst_72 : f32 to vector<16x64xf32>
    %150 = arith.select %148, %145, %149 : vector<16x64xi1>, vector<16x64xf32>
    %c48_i32 = arith.constant 48 : i32
    %151 = tpu.dynamic_rotate %138 by %c48_i32 dim 1 : vector<16x64xf32>, i32 -> vector<16x64xf32>
    %152 = tpu.iota {dimensions = array<i32: 1>} : vector<16x64xi32>
    %c48_i32_73 = arith.constant 48 : i32
    %153 = vector.broadcast %c48_i32_73 : i32 to vector<16x64xi32>
    %154 = arith.cmpi slt, %152, %153 : vector<16x64xi32>
    %cst_74 = arith.constant 0.000000e+00 : f32
    %155 = vector.broadcast %cst_74 : f32 to vector<16x64xf32>
    %156 = arith.select %154, %151, %155 : vector<16x64xi1>, vector<16x64xf32>
    %157 = tpu.concatenate %144, %138, %150, %156 in 0 : vector<16x64xf32>, vector<16x64xf32>, vector<16x64xf32>, vector<16x64xf32> -> vector<64x64xf32>
    %158 = arith.truncf %157 : vector<64x64xf32> to vector<64x64xbf16>
    %c5 = arith.constant 5 : index
    %c0_75 = arith.constant 0 : index
    %c0_76 = arith.constant 0 : index
    %159 = vector.load %arg2[%c5, %c0_75, %c0_76] : memref<12x16x64xbf16, #tpu.memory_space<vmem>>, vector<1x16x64xbf16>
    %160 = vector.shape_cast %159 : vector<1x16x64xbf16> to vector<16x64xbf16>
    %cst_77 = arith.constant dense<0.000000e+00> : vector<16x64xf32>
    %161 = tpu.matmul %160, %158, %cst_77 {dimension_numbers = #tpu.dot_dimension_numbers<[1], [0], [0], [1], [0, 0, 1, 1], [], []>} : vector<16x64xbf16>, vector<64x64xbf16>, vector<16x64xf32> -> vector<16x64xf32>
    %c5_78 = arith.constant 5 : index
    %c0_79 = arith.constant 0 : index
    %c0_80 = arith.constant 0 : index
    %162 = vector.load %arg3[%c5_78, %c0_79, %c0_80] : memref<12x16x1xf32, #tpu.memory_space<vmem>>, vector<1x16x1xf32>
    %163 = vector.shape_cast %162 : vector<1x16x1xf32> to vector<16x1xf32>
    %164 = vector.broadcast %163 : vector<16x1xf32> to vector<16x64xf32>
    %165 = arith.addf %161, %164 : vector<16x64xf32>
    %cst_81 = arith.constant 2.000000e-01 : f32
    %166 = vector.broadcast %cst_81 : f32 to vector<16x64xf32>
    %167 = arith.mulf %166, %165 : vector<16x64xf32>
    %168 = arith.maximumf %165, %167 : vector<16x64xf32>
    %c16_i32 = arith.constant 16 : i32
    %169 = tpu.dynamic_rotate %168 by %c16_i32 dim 1 : vector<16x64xf32>, i32 -> vector<16x64xf32>
    %170 = tpu.iota {dimensions = array<i32: 1>} : vector<16x64xi32>
    %c16_i32_82 = arith.constant 16 : i32
    %171 = vector.broadcast %c16_i32_82 : i32 to vector<16x64xi32>
    %172 = arith.cmpi sge, %170, %171 : vector<16x64xi32>
    %cst_83 = arith.constant 0.000000e+00 : f32
    %173 = vector.broadcast %cst_83 : f32 to vector<16x64xf32>
    %174 = arith.select %172, %169, %173 : vector<16x64xi1>, vector<16x64xf32>
    %c48_i32_84 = arith.constant 48 : i32
    %175 = tpu.dynamic_rotate %168 by %c48_i32_84 dim 1 : vector<16x64xf32>, i32 -> vector<16x64xf32>
    %176 = tpu.iota {dimensions = array<i32: 1>} : vector<16x64xi32>
    %c48_i32_85 = arith.constant 48 : i32
    %177 = vector.broadcast %c48_i32_85 : i32 to vector<16x64xi32>
    %178 = arith.cmpi slt, %176, %177 : vector<16x64xi32>
    %cst_86 = arith.constant 0.000000e+00 : f32
    %179 = vector.broadcast %cst_86 : f32 to vector<16x64xf32>
    %180 = arith.select %178, %175, %179 : vector<16x64xi1>, vector<16x64xf32>
    %c32_i32 = arith.constant 32 : i32
    %181 = tpu.dynamic_rotate %168 by %c32_i32 dim 1 : vector<16x64xf32>, i32 -> vector<16x64xf32>
    %182 = tpu.iota {dimensions = array<i32: 1>} : vector<16x64xi32>
    %c32_i32_87 = arith.constant 32 : i32
    %183 = vector.broadcast %c32_i32_87 : i32 to vector<16x64xi32>
    %184 = arith.cmpi slt, %182, %183 : vector<16x64xi32>
    %cst_88 = arith.constant 0.000000e+00 : f32
    %185 = vector.broadcast %cst_88 : f32 to vector<16x64xf32>
    %186 = arith.select %184, %181, %185 : vector<16x64xi1>, vector<16x64xf32>
    %187 = tpu.concatenate %174, %168, %180, %186 in 0 : vector<16x64xf32>, vector<16x64xf32>, vector<16x64xf32>, vector<16x64xf32> -> vector<64x64xf32>
    %188 = arith.truncf %187 : vector<64x64xf32> to vector<64x64xbf16>
    %c6 = arith.constant 6 : index
    %c0_89 = arith.constant 0 : index
    %c0_90 = arith.constant 0 : index
    %189 = vector.load %arg2[%c6, %c0_89, %c0_90] : memref<12x16x64xbf16, #tpu.memory_space<vmem>>, vector<1x16x64xbf16>
    %190 = vector.shape_cast %189 : vector<1x16x64xbf16> to vector<16x64xbf16>
    %cst_91 = arith.constant dense<0.000000e+00> : vector<16x64xf32>
    %191 = tpu.matmul %190, %188, %cst_91 {dimension_numbers = #tpu.dot_dimension_numbers<[1], [0], [0], [1], [0, 0, 1, 1], [], []>} : vector<16x64xbf16>, vector<64x64xbf16>, vector<16x64xf32> -> vector<16x64xf32>
    %c6_92 = arith.constant 6 : index
    %c0_93 = arith.constant 0 : index
    %c0_94 = arith.constant 0 : index
    %192 = vector.load %arg3[%c6_92, %c0_93, %c0_94] : memref<12x16x1xf32, #tpu.memory_space<vmem>>, vector<1x16x1xf32>
    %193 = vector.shape_cast %192 : vector<1x16x1xf32> to vector<16x1xf32>
    %194 = vector.broadcast %193 : vector<16x1xf32> to vector<16x64xf32>
    %195 = arith.addf %191, %194 : vector<16x64xf32>
    %cst_95 = arith.constant 2.000000e-01 : f32
    %196 = vector.broadcast %cst_95 : f32 to vector<16x64xf32>
    %197 = arith.mulf %196, %195 : vector<16x64xf32>
    %198 = arith.maximumf %195, %197 : vector<16x64xf32>
    %199 = tpu.iota {dimensions = array<i32: 1>} : vector<16x64xi32>
    %c31_i32 = arith.constant 31 : i32
    %200 = vector.broadcast %c31_i32 : i32 to vector<16x64xi32>
    %201 = arith.andi %199, %200 : vector<16x64xi32>
    %c0_i32 = arith.constant 0 : i32
    %202 = vector.broadcast %c0_i32 : i32 to vector<16x64xi32>
    %203 = arith.cmpi eq, %201, %202 : vector<16x64xi32>
    %c16_i32_96 = arith.constant 16 : i32
    %204 = tpu.dynamic_rotate %198 by %c16_i32_96 dim 1 : vector<16x64xf32>, i32 -> vector<16x64xf32>
    %205 = arith.select %203, %198, %204 : vector<16x64xi1>, vector<16x64xf32>
    %206 = arith.addf %205, %168 : vector<16x64xf32>
    %c16_i32_97 = arith.constant 16 : i32
    %207 = tpu.dynamic_rotate %206 by %c16_i32_97 dim 1 : vector<16x64xf32>, i32 -> vector<16x64xf32>
    %208 = tpu.iota {dimensions = array<i32: 1>} : vector<16x64xi32>
    %c16_i32_98 = arith.constant 16 : i32
    %209 = vector.broadcast %c16_i32_98 : i32 to vector<16x64xi32>
    %210 = arith.cmpi sge, %208, %209 : vector<16x64xi32>
    %cst_99 = arith.constant 0.000000e+00 : f32
    %211 = vector.broadcast %cst_99 : f32 to vector<16x64xf32>
    %212 = arith.select %210, %207, %211 : vector<16x64xi1>, vector<16x64xf32>
    %c48_i32_100 = arith.constant 48 : i32
    %213 = tpu.dynamic_rotate %206 by %c48_i32_100 dim 1 : vector<16x64xf32>, i32 -> vector<16x64xf32>
    %214 = tpu.iota {dimensions = array<i32: 1>} : vector<16x64xi32>
    %c48_i32_101 = arith.constant 48 : i32
    %215 = vector.broadcast %c48_i32_101 : i32 to vector<16x64xi32>
    %216 = arith.cmpi slt, %214, %215 : vector<16x64xi32>
    %cst_102 = arith.constant 0.000000e+00 : f32
    %217 = vector.broadcast %cst_102 : f32 to vector<16x64xf32>
    %218 = arith.select %216, %213, %217 : vector<16x64xi1>, vector<16x64xf32>
    %219 = tpu.concatenate %212, %206, %218 in 0 : vector<16x64xf32>, vector<16x64xf32>, vector<16x64xf32> -> vector<48x64xf32>
    %220 = arith.truncf %219 : vector<48x64xf32> to vector<48x64xbf16>
    %c7 = arith.constant 7 : index
    %c0_103 = arith.constant 0 : index
    %c0_104 = arith.constant 0 : index
    %221 = vector.load %arg2[%c7, %c0_103, %c0_104] : memref<12x16x64xbf16, #tpu.memory_space<vmem>>, vector<1x16x48xbf16>
    %222 = vector.shape_cast %221 : vector<1x16x48xbf16> to vector<16x48xbf16>
    %cst_105 = arith.constant dense<0.000000e+00> : vector<16x64xf32>
    %223 = tpu.matmul %222, %220, %cst_105 {dimension_numbers = #tpu.dot_dimension_numbers<[1], [0], [0], [1], [0, 0, 1, 1], [], []>} : vector<16x48xbf16>, vector<48x64xbf16>, vector<16x64xf32> -> vector<16x64xf32>
    %c7_106 = arith.constant 7 : index
    %c0_107 = arith.constant 0 : index
    %c0_108 = arith.constant 0 : index
    %224 = vector.load %arg3[%c7_106, %c0_107, %c0_108] : memref<12x16x1xf32, #tpu.memory_space<vmem>>, vector<1x16x1xf32>
    %225 = vector.shape_cast %224 : vector<1x16x1xf32> to vector<16x1xf32>
    %226 = vector.broadcast %225 : vector<16x1xf32> to vector<16x64xf32>
    %227 = arith.addf %223, %226 : vector<16x64xf32>
    %cst_109 = arith.constant 2.000000e-01 : f32
    %228 = vector.broadcast %cst_109 : f32 to vector<16x64xf32>
    %229 = arith.mulf %228, %227 : vector<16x64xf32>
    %230 = arith.maximumf %227, %229 : vector<16x64xf32>
    %231 = tpu.iota {dimensions = array<i32: 1>} : vector<16x64xi32>
    %c15_i32 = arith.constant 15 : i32
    %232 = vector.broadcast %c15_i32 : i32 to vector<16x64xi32>
    %233 = arith.andi %231, %232 : vector<16x64xi32>
    %c0_i32_110 = arith.constant 0 : i32
    %234 = vector.broadcast %c0_i32_110 : i32 to vector<16x64xi32>
    %235 = arith.cmpi eq, %233, %234 : vector<16x64xi32>
    %c8_i32_111 = arith.constant 8 : i32
    %236 = tpu.dynamic_rotate %230 by %c8_i32_111 dim 1 : vector<16x64xf32>, i32 -> vector<16x64xf32>
    %237 = arith.select %235, %230, %236 : vector<16x64xi1>, vector<16x64xf32>
    %238 = arith.addf %237, %138 : vector<16x64xf32>
    %c8_i32_112 = arith.constant 8 : i32
    %239 = tpu.dynamic_rotate %238 by %c8_i32_112 dim 1 : vector<16x64xf32>, i32 -> vector<16x64xf32>
    %240 = tpu.iota {dimensions = array<i32: 1>} : vector<16x64xi32>
    %c8_i32_113 = arith.constant 8 : i32
    %241 = vector.broadcast %c8_i32_113 : i32 to vector<16x64xi32>
    %242 = arith.cmpi sge, %240, %241 : vector<16x64xi32>
    %cst_114 = arith.constant 0.000000e+00 : f32
    %243 = vector.broadcast %cst_114 : f32 to vector<16x64xf32>
    %244 = arith.select %242, %239, %243 : vector<16x64xi1>, vector<16x64xf32>
    %c56_i32_115 = arith.constant 56 : i32
    %245 = tpu.dynamic_rotate %238 by %c56_i32_115 dim 1 : vector<16x64xf32>, i32 -> vector<16x64xf32>
    %246 = tpu.iota {dimensions = array<i32: 1>} : vector<16x64xi32>
    %c56_i32_116 = arith.constant 56 : i32
    %247 = vector.broadcast %c56_i32_116 : i32 to vector<16x64xi32>
    %248 = arith.cmpi slt, %246, %247 : vector<16x64xi32>
    %cst_117 = arith.constant 0.000000e+00 : f32
    %249 = vector.broadcast %cst_117 : f32 to vector<16x64xf32>
    %250 = arith.select %248, %245, %249 : vector<16x64xi1>, vector<16x64xf32>
    %251 = tpu.concatenate %244, %238, %250 in 0 : vector<16x64xf32>, vector<16x64xf32>, vector<16x64xf32> -> vector<48x64xf32>
    %252 = arith.truncf %251 : vector<48x64xf32> to vector<48x64xbf16>
    %c8 = arith.constant 8 : index
    %c0_118 = arith.constant 0 : index
    %c0_119 = arith.constant 0 : index
    %253 = vector.load %arg2[%c8, %c0_118, %c0_119] : memref<12x16x64xbf16, #tpu.memory_space<vmem>>, vector<1x16x48xbf16>
    %254 = vector.shape_cast %253 : vector<1x16x48xbf16> to vector<16x48xbf16>
    %cst_120 = arith.constant dense<0.000000e+00> : vector<16x64xf32>
    %255 = tpu.matmul %254, %252, %cst_120 {dimension_numbers = #tpu.dot_dimension_numbers<[1], [0], [0], [1], [0, 0, 1, 1], [], []>} : vector<16x48xbf16>, vector<48x64xbf16>, vector<16x64xf32> -> vector<16x64xf32>
    %c8_121 = arith.constant 8 : index
    %c0_122 = arith.constant 0 : index
    %c0_123 = arith.constant 0 : index
    %256 = vector.load %arg3[%c8_121, %c0_122, %c0_123] : memref<12x16x1xf32, #tpu.memory_space<vmem>>, vector<1x16x1xf32>
    %257 = vector.shape_cast %256 : vector<1x16x1xf32> to vector<16x1xf32>
    %258 = vector.broadcast %257 : vector<16x1xf32> to vector<16x64xf32>
    %259 = arith.addf %255, %258 : vector<16x64xf32>
    %cst_124 = arith.constant 2.000000e-01 : f32
    %260 = vector.broadcast %cst_124 : f32 to vector<16x64xf32>
    %261 = arith.mulf %260, %259 : vector<16x64xf32>
    %262 = arith.maximumf %259, %261 : vector<16x64xf32>
    %263 = tpu.iota {dimensions = array<i32: 1>} : vector<16x64xi32>
    %c7_i32 = arith.constant 7 : i32
    %264 = vector.broadcast %c7_i32 : i32 to vector<16x64xi32>
    %265 = arith.andi %263, %264 : vector<16x64xi32>
    %c0_i32_125 = arith.constant 0 : i32
    %266 = vector.broadcast %c0_i32_125 : i32 to vector<16x64xi32>
    %267 = arith.cmpi eq, %265, %266 : vector<16x64xi32>
    %c4_i32_126 = arith.constant 4 : i32
    %268 = tpu.dynamic_rotate %262 by %c4_i32_126 dim 1 : vector<16x64xf32>, i32 -> vector<16x64xf32>
    %269 = arith.select %267, %262, %268 : vector<16x64xi1>, vector<16x64xf32>
    %270 = arith.addf %269, %108 : vector<16x64xf32>
    %c4_i32_127 = arith.constant 4 : i32
    %271 = tpu.dynamic_rotate %270 by %c4_i32_127 dim 1 : vector<16x64xf32>, i32 -> vector<16x64xf32>
    %272 = tpu.iota {dimensions = array<i32: 1>} : vector<16x64xi32>
    %c4_i32_128 = arith.constant 4 : i32
    %273 = vector.broadcast %c4_i32_128 : i32 to vector<16x64xi32>
    %274 = arith.cmpi sge, %272, %273 : vector<16x64xi32>
    %cst_129 = arith.constant 0.000000e+00 : f32
    %275 = vector.broadcast %cst_129 : f32 to vector<16x64xf32>
    %276 = arith.select %274, %271, %275 : vector<16x64xi1>, vector<16x64xf32>
    %c60_i32_130 = arith.constant 60 : i32
    %277 = tpu.dynamic_rotate %270 by %c60_i32_130 dim 1 : vector<16x64xf32>, i32 -> vector<16x64xf32>
    %278 = tpu.iota {dimensions = array<i32: 1>} : vector<16x64xi32>
    %c60_i32_131 = arith.constant 60 : i32
    %279 = vector.broadcast %c60_i32_131 : i32 to vector<16x64xi32>
    %280 = arith.cmpi slt, %278, %279 : vector<16x64xi32>
    %cst_132 = arith.constant 0.000000e+00 : f32
    %281 = vector.broadcast %cst_132 : f32 to vector<16x64xf32>
    %282 = arith.select %280, %277, %281 : vector<16x64xi1>, vector<16x64xf32>
    %283 = tpu.concatenate %276, %270, %282 in 0 : vector<16x64xf32>, vector<16x64xf32>, vector<16x64xf32> -> vector<48x64xf32>
    %284 = arith.truncf %283 : vector<48x64xf32> to vector<48x64xbf16>
    %c9 = arith.constant 9 : index
    %c0_133 = arith.constant 0 : index
    %c0_134 = arith.constant 0 : index
    %285 = vector.load %arg2[%c9, %c0_133, %c0_134] : memref<12x16x64xbf16, #tpu.memory_space<vmem>>, vector<1x16x48xbf16>
    %286 = vector.shape_cast %285 : vector<1x16x48xbf16> to vector<16x48xbf16>
    %cst_135 = arith.constant dense<0.000000e+00> : vector<16x64xf32>
    %287 = tpu.matmul %286, %284, %cst_135 {dimension_numbers = #tpu.dot_dimension_numbers<[1], [0], [0], [1], [0, 0, 1, 1], [], []>} : vector<16x48xbf16>, vector<48x64xbf16>, vector<16x64xf32> -> vector<16x64xf32>
    %c9_136 = arith.constant 9 : index
    %c0_137 = arith.constant 0 : index
    %c0_138 = arith.constant 0 : index
    %288 = vector.load %arg3[%c9_136, %c0_137, %c0_138] : memref<12x16x1xf32, #tpu.memory_space<vmem>>, vector<1x16x1xf32>
    %289 = vector.shape_cast %288 : vector<1x16x1xf32> to vector<16x1xf32>
    %290 = vector.broadcast %289 : vector<16x1xf32> to vector<16x64xf32>
    %291 = arith.addf %287, %290 : vector<16x64xf32>
    %cst_139 = arith.constant 2.000000e-01 : f32
    %292 = vector.broadcast %cst_139 : f32 to vector<16x64xf32>
    %293 = arith.mulf %292, %291 : vector<16x64xf32>
    %294 = arith.maximumf %291, %293 : vector<16x64xf32>
    %295 = tpu.iota {dimensions = array<i32: 1>} : vector<16x64xi32>
    %c3_i32 = arith.constant 3 : i32
    %296 = vector.broadcast %c3_i32 : i32 to vector<16x64xi32>
    %297 = arith.andi %295, %296 : vector<16x64xi32>
    %c0_i32_140 = arith.constant 0 : i32
    %298 = vector.broadcast %c0_i32_140 : i32 to vector<16x64xi32>
    %299 = arith.cmpi eq, %297, %298 : vector<16x64xi32>
    %c2_i32_141 = arith.constant 2 : i32
    %300 = tpu.dynamic_rotate %294 by %c2_i32_141 dim 1 : vector<16x64xf32>, i32 -> vector<16x64xf32>
    %301 = arith.select %299, %294, %300 : vector<16x64xi1>, vector<16x64xf32>
    %302 = arith.addf %301, %78 : vector<16x64xf32>
    %c2_i32_142 = arith.constant 2 : i32
    %303 = tpu.dynamic_rotate %302 by %c2_i32_142 dim 1 : vector<16x64xf32>, i32 -> vector<16x64xf32>
    %304 = tpu.iota {dimensions = array<i32: 1>} : vector<16x64xi32>
    %c2_i32_143 = arith.constant 2 : i32
    %305 = vector.broadcast %c2_i32_143 : i32 to vector<16x64xi32>
    %306 = arith.cmpi sge, %304, %305 : vector<16x64xi32>
    %cst_144 = arith.constant 0.000000e+00 : f32
    %307 = vector.broadcast %cst_144 : f32 to vector<16x64xf32>
    %308 = arith.select %306, %303, %307 : vector<16x64xi1>, vector<16x64xf32>
    %c62_i32_145 = arith.constant 62 : i32
    %309 = tpu.dynamic_rotate %302 by %c62_i32_145 dim 1 : vector<16x64xf32>, i32 -> vector<16x64xf32>
    %310 = tpu.iota {dimensions = array<i32: 1>} : vector<16x64xi32>
    %c62_i32_146 = arith.constant 62 : i32
    %311 = vector.broadcast %c62_i32_146 : i32 to vector<16x64xi32>
    %312 = arith.cmpi slt, %310, %311 : vector<16x64xi32>
    %cst_147 = arith.constant 0.000000e+00 : f32
    %313 = vector.broadcast %cst_147 : f32 to vector<16x64xf32>
    %314 = arith.select %312, %309, %313 : vector<16x64xi1>, vector<16x64xf32>
    %315 = tpu.concatenate %308, %302, %314 in 0 : vector<16x64xf32>, vector<16x64xf32>, vector<16x64xf32> -> vector<48x64xf32>
    %316 = arith.truncf %315 : vector<48x64xf32> to vector<48x64xbf16>
    %c10 = arith.constant 10 : index
    %c0_148 = arith.constant 0 : index
    %c0_149 = arith.constant 0 : index
    %317 = vector.load %arg2[%c10, %c0_148, %c0_149] : memref<12x16x64xbf16, #tpu.memory_space<vmem>>, vector<1x16x48xbf16>
    %318 = vector.shape_cast %317 : vector<1x16x48xbf16> to vector<16x48xbf16>
    %cst_150 = arith.constant dense<0.000000e+00> : vector<16x64xf32>
    %319 = tpu.matmul %318, %316, %cst_150 {dimension_numbers = #tpu.dot_dimension_numbers<[1], [0], [0], [1], [0, 0, 1, 1], [], []>} : vector<16x48xbf16>, vector<48x64xbf16>, vector<16x64xf32> -> vector<16x64xf32>
    %c10_151 = arith.constant 10 : index
    %c0_152 = arith.constant 0 : index
    %c0_153 = arith.constant 0 : index
    %320 = vector.load %arg3[%c10_151, %c0_152, %c0_153] : memref<12x16x1xf32, #tpu.memory_space<vmem>>, vector<1x16x1xf32>
    %321 = vector.shape_cast %320 : vector<1x16x1xf32> to vector<16x1xf32>
    %322 = vector.broadcast %321 : vector<16x1xf32> to vector<16x64xf32>
    %323 = arith.addf %319, %322 : vector<16x64xf32>
    %cst_154 = arith.constant 2.000000e-01 : f32
    %324 = vector.broadcast %cst_154 : f32 to vector<16x64xf32>
    %325 = arith.mulf %324, %323 : vector<16x64xf32>
    %326 = arith.maximumf %323, %325 : vector<16x64xf32>
    %327 = tpu.iota {dimensions = array<i32: 1>} : vector<16x64xi32>
    %c1_i32_155 = arith.constant 1 : i32
    %328 = vector.broadcast %c1_i32_155 : i32 to vector<16x64xi32>
    %329 = arith.andi %327, %328 : vector<16x64xi32>
    %c0_i32_156 = arith.constant 0 : i32
    %330 = vector.broadcast %c0_i32_156 : i32 to vector<16x64xi32>
    %331 = arith.cmpi eq, %329, %330 : vector<16x64xi32>
    %c1_i32_157 = arith.constant 1 : i32
    %332 = tpu.dynamic_rotate %326 by %c1_i32_157 dim 1 : vector<16x64xf32>, i32 -> vector<16x64xf32>
    %333 = arith.select %331, %326, %332 : vector<16x64xi1>, vector<16x64xf32>
    %334 = arith.addf %333, %48 : vector<16x64xf32>
    %c1_i32_158 = arith.constant 1 : i32
    %335 = tpu.dynamic_rotate %334 by %c1_i32_158 dim 1 : vector<16x64xf32>, i32 -> vector<16x64xf32>
    %336 = tpu.iota {dimensions = array<i32: 1>} : vector<16x64xi32>
    %c1_i32_159 = arith.constant 1 : i32
    %337 = vector.broadcast %c1_i32_159 : i32 to vector<16x64xi32>
    %338 = arith.cmpi sge, %336, %337 : vector<16x64xi32>
    %cst_160 = arith.constant 0.000000e+00 : f32
    %339 = vector.broadcast %cst_160 : f32 to vector<16x64xf32>
    %340 = arith.select %338, %335, %339 : vector<16x64xi1>, vector<16x64xf32>
    %c63_i32_161 = arith.constant 63 : i32
    %341 = tpu.dynamic_rotate %334 by %c63_i32_161 dim 1 : vector<16x64xf32>, i32 -> vector<16x64xf32>
    %342 = tpu.iota {dimensions = array<i32: 1>} : vector<16x64xi32>
    %c63_i32_162 = arith.constant 63 : i32
    %343 = vector.broadcast %c63_i32_162 : i32 to vector<16x64xi32>
    %344 = arith.cmpi slt, %342, %343 : vector<16x64xi32>
    %cst_163 = arith.constant 0.000000e+00 : f32
    %345 = vector.broadcast %cst_163 : f32 to vector<16x64xf32>
    %346 = arith.select %344, %341, %345 : vector<16x64xi1>, vector<16x64xf32>
    %347 = tpu.concatenate %340, %334, %346 in 0 : vector<16x64xf32>, vector<16x64xf32>, vector<16x64xf32> -> vector<48x64xf32>
    %348 = arith.truncf %347 : vector<48x64xf32> to vector<48x64xbf16>
    %c11 = arith.constant 11 : index
    %c0_164 = arith.constant 0 : index
    %c0_165 = arith.constant 0 : index
    %349 = vector.load %arg2[%c11, %c0_164, %c0_165] : memref<12x16x64xbf16, #tpu.memory_space<vmem>>, vector<1x16x48xbf16>
    %350 = vector.shape_cast %349 : vector<1x16x48xbf16> to vector<16x48xbf16>
    %cst_166 = arith.constant dense<0.000000e+00> : vector<16x64xf32>
    %351 = tpu.matmul %350, %348, %cst_166 {dimension_numbers = #tpu.dot_dimension_numbers<[1], [0], [0], [1], [0, 0, 1, 1], [], []>} : vector<16x48xbf16>, vector<48x64xbf16>, vector<16x64xf32> -> vector<16x64xf32>
    %c11_167 = arith.constant 11 : index
    %c0_168 = arith.constant 0 : index
    %c0_169 = arith.constant 0 : index
    %352 = vector.load %arg3[%c11_167, %c0_168, %c0_169] : memref<12x16x1xf32, #tpu.memory_space<vmem>>, vector<1x16x1xf32>
    %353 = vector.shape_cast %352 : vector<1x16x1xf32> to vector<16x1xf32>
    %354 = vector.broadcast %353 : vector<16x1xf32> to vector<16x64xf32>
    %355 = arith.addf %351, %354 : vector<16x64xf32>
    %cst_170 = arith.constant 2.000000e-01 : f32
    %356 = vector.broadcast %cst_170 : f32 to vector<16x64xf32>
    %357 = arith.mulf %356, %355 : vector<16x64xf32>
    %358 = arith.maximumf %355, %357 : vector<16x64xf32>
    %c0_171 = arith.constant 0 : index
    %c0_172 = arith.constant 0 : index
    %359 = vector.load %arg4[%c0_171, %c0_172] : memref<16x64xf32, #tpu.memory_space<vmem>>, vector<16x64xf32>
    tpu.vector_store %arg4[%c0_171, %c0_172], %358 {strides = array<i32>} : memref<16x64xf32, #tpu.memory_space<vmem>>, vector<16x64xf32>,
    return
  }
  func.func @transform_0(%arg0: i32) -> (i32, i32) {
    %c0_i32 = arith.constant 0 : i32
    %c0_i32_0 = arith.constant 0 : i32
    %c0_i32_1 = arith.constant 0 : i32
    return %c0_i32, %c0_i32_0 : i32, i32
  }
  func.func @transform_1(%arg0: i32) -> (i32, i32, i32) {
    %c0_i32 = arith.constant 0 : i32
    %c0_i32_0 = arith.constant 0 : i32
    %c0_i32_1 = arith.constant 0 : i32
    %c0_i32_2 = arith.constant 0 : i32
    return %c0_i32, %c0_i32_0, %c0_i32_1 : i32, i32, i32
  }
  func.func @transform_2(%arg0: i32) -> (i32, i32, i32) {
    %c0_i32 = arith.constant 0 : i32
    %c0_i32_0 = arith.constant 0 : i32
    %c0_i32_1 = arith.constant 0 : i32
    %c0_i32_2 = arith.constant 0 : i32
    return %c0_i32, %c0_i32_0, %c0_i32_1 : i32, i32, i32
  }
  func.func @transform_3(%arg0: i32) -> (i32, i32) {
    %c0_i32 = arith.constant 0 : i32
    %c0_i32_0 = arith.constant 0 : i32
    %c0_i32_1 = arith.constant 0 : i32
    return %c0_i32, %c0_i32_0 : i32, i32
  }
}

</mosaic_0001>

<llo_original>
// kernel: unet1d_forward.1
$region0: #{unet1d_forward.1}
  #allocation0 [shape = 'u32[]', space=smem, size = 0x4, offset = 0x4, fixed_abs, tag = 'smem constant byte address 0x4 - core index']
  #allocation1 [shape = 'u32[72,128]{1,0:T(1,128)}', space=vmem, size = 0x9000, scoped, tag = 'internal scratch']
  %s0 = inlined_call_operand.vmem [shape: f32[8,64], index: 0, kind: input, shape index: {}]
  %s1 = inlined_call_operand.vmem [shape: bf16[12,16,64], index: 1, kind: input, shape index: {}]
  %s2 = inlined_call_operand.vmem [shape: f32[12,16,1], index: 2, kind: input, shape index: {}]
  %s3 = inlined_call_operand.hbm [shape: f32[16,64], index: 3, kind: output, shape index: {}]
  %s4 = sld [smem:[#allocation0]]
  $region22: #{unet1d_forward.1} parent=0
    _
  %s6 = ssub.s32 1, %s4
  %s7 = scalar_select 0, %s6, %s4
  $region1: #{unet1d_forward.1} parent=0
    #allocation2 [shape = 'u8[8192]{0}', space=vmem, size = 0x2000, scoped, tag = 'output window, operand 0, single buffered']
    #allocation3 [shape = 's32[1]{0}', space=sflag, size = 0x4, scoped, tag = 'scoped memory for unet1d_forward.1']
    %8 = vsyncpa [#allocation3], 0
    // Predicated region
    $region2: #{unet1d_forward.1} parent=1 // pred_check
      _
    $region3: #{unet1d_forward.1} parent=1 // pred_check_branch
      %10 = sbr.rel (0) target = $region5
    $region4: #{unet1d_forward.1} parent=1 // pred_region
      _
    $region5: #{unet1d_forward.1} parent=1 // pred_fallthru
      _
    // Predicated region
    $region6: #{unet1d_forward.1} parent=1 // pred_check
      _
    $region7: #{unet1d_forward.1} parent=1 // pred_check_branch
      %12 = sbr.rel (0) target = $region9
    $region8: #{unet1d_forward.1} parent=1 // pred_region
      _
    $region9: #{unet1d_forward.1} parent=1 // pred_fallthru
      _
    // Predicated region
    $region10: #{unet1d_forward.1} parent=1 // pred_check
      _
    $region11: #{unet1d_forward.1} parent=1 // pred_check_branch
      %14 = sbr.rel (0) target = $region13
    $region12: #{unet1d_forward.1} parent=1 // pred_region
      _
    $region13: #{unet1d_forward.1} parent=1 // pred_fallthru
      _
    %v16 = vld [vmem:[%s0] sm:$0xff]
    %vm17 = vcmask 1048064
    %18 = vrot.lane.b32.xlu0 %v16, 64
    %v19 = vpop.permute.xlu0 %18
    %v20 = vsel %vm17, %v19, %v16
    %21 = vrot.lane.b32.xlu0 %v20, 64
    %v22 = vpop.permute.xlu0 %21
    %v23 = vsel %vm17, %v22, %v16
    %v24 = vlaneseq
    %v25 = vand.u32 %v24, 127
    %vm26 = vcmp.ge.s32.totalorder %v25, 1
    %28 = vrot.lane.b32.xlu0 %v23, 65
    %v29 = vpop.permute.xlu0 %28
    %v31 = vsel %vm26, %v29, 0.0
    %vm32 = vcmp.lt.s32.totalorder %v25, 63
    %33 = vrot.lane.b32.xlu0 %v23, 127
    %v34 = vpop.permute.xlu0 %33
    %v36 = vsel %vm32, %v34, 0.0
    %v37 = vpack.c.bf16 %v16, %v31
    %v38 = vpack.c.bf16 %v36, %v36
    %v39 = vld [vmem:[%s1] sm:$0xf]
    %v40 = vld [vmem:[%s1 + $0x4] sm:$0xf]
    %v41 = vld [vmem:[%s2] sm:$0xff]
    %v42 = vld [vmem:[%s2 + $0x8] sm:$0xff]
    %44 = vset.pattern.permute.xlu0 0
    %45 = vperm.xlu0 %44, %v41
    %v46 = vpop.permute.xlu0 %45
    %49 = vset.pattern.permute.xlu0 0
    %50 = vperm.xlu0 %49, %v42
    %v51 = vpop.permute.xlu0 %50
    %v55 = vunpack.c.l.b16 %v39
    %v56 = vunpack.c.l.b16 %v40
    %v57 = vpack.c.b16 %v56, %v55
    %vm58 = vcmask 195584
    %v60 = vsel %vm58, %v57, 0
    %vm62 = vcmask 1043456
    %v64 = vsel %vm62, %v38, 0
    %66 = vmatpush.bf16.msra.mxu0 0
    %67 = vmatpush.bf16.msra.mxu0 0
    %68 = vmatpush.bf16.msra.mxu0 0
    %69 = vmatpush.bf16.msra.mxu0 0
    %70 = vmatpush.bf16.msra.mxu0 0
    %71 = vmatpush.bf16.msra.mxu0 0
    %72 = vmatpush.bf16.msra.mxu0 %v64
    %73 = vmatpush.bf16.msra.mxu0 %v37
    %74 = vmatmul.bf16.gmra.mxu0 %v60
    %v75 = vpop.f32.mrf.mxu0
    %v76 = vadd.f32 %v46, %v75
    %v77 = vpop.f32.mrf.mxu0
    %v78 = vadd.f32 %v51, %v77
    %79 = vdwg.mxu0
    %v80 = vmul.f32 %v76, 0.2
    %v81 = vmul.f32 %v78, 0.2
    %v82 = vmax.f32 %v76, %v80
    %v83 = vmax.f32 %v78, %v81
    %84 = vrot.lane.b32.xlu0 %v82, 64
    %v85 = vpop.permute.xlu0 %84
    %v86 = vsel %vm17, %v85, %v82
    %87 = vrot.lane.b32.xlu0 %v83, 64
    %v88 = vpop.permute.xlu0 %87
    %v89 = vsel %vm17, %v88, %v83
    %90 = vrot.lane.b32.xlu0 %v86, 64
    %v91 = vpop.permute.xlu0 %90
    %92 = vrot.lane.b32.xlu0 %v89, 64
    %v93 = vpop.permute.xlu0 %92
    %v94 = vsel %vm17, %v91, %v82
    %v95 = vsel %vm17, %v93, %v83
    %98 = vrot.lane.b32.xlu0 %v94, 65
    %v99 = vpop.permute.xlu0 %98
    %100 = vrot.lane.b32.xlu0 %v95, 65
    %v101 = vpop.permute.xlu0 %100
    %v104 = vsel %vm26, %v99, 0.0
    %v105 = vsel %vm26, %v101, 0.0
    %106 = vrot.lane.b32.xlu0 %v94, 127
    %v107 = vpop.permute.xlu0 %106
    %108 = vrot.lane.b32.xlu0 %v95, 127
    %v109 = vpop.permute.xlu0 %108
    %v112 = vsel %vm32, %v107, 0.0
    %v113 = vsel %vm32, %v109, 0.0
    %v114 = vpack.c.bf16 %v105, %v104
    %v115 = vpack.c.bf16 %v83, %v82
    %v116 = vpack.c.bf16 %v113, %v112
    %s117 = scalar_lea.vmem %s1, 8
    %v118 = vld [vmem:[%s117] sm:$0xf]
    %v119 = vld [vmem:[%s117 + $0x4] sm:$0xf]
    %s120 = scalar_lea.vmem %s2, 16
    %v121 = vld [vmem:[%s120] sm:$0xff]
    %v122 = vld [vmem:[%s120 + $0x8] sm:$0xff]
    %124 = vset.pattern.permute.xlu0 0
    %125 = vperm.xlu0 %124, %v121
    %v126 = vpop.permute.xlu0 %125
    %129 = vset.pattern.permute.xlu0 0
    %130 = vperm.xlu0 %129, %v122
    %v131 = vpop.permute.xlu0 %130
    %v135 = vunpack.c.l.b16 %v118
    %v136 = vunpack.c.l.b16 %v119
    %v137 = vpack.c.b16 %v136, %v135
    %vm138 = vcmask 392192
    %v140 = vsel %vm138, %v137, 0
    %142 = vmatpush.bf16.msra.mxu0 0
    %143 = vmatpush.bf16.msra.mxu0 0
    %144 = vmatpush.bf16.msra.mxu0 0
    %145 = vmatpush.bf16.msra.mxu0 0
    %146 = vmatpush.bf16.msra.mxu0 0
    %147 = vmatpush.bf16.msra.mxu0 %v116
    %148 = vmatpush.bf16.msra.mxu0 %v115
    %149 = vmatpush.bf16.msra.mxu0 %v114
    %150 = vmatmul.bf16.gmra.mxu0 %v140
    %v151 = vpop.f32.mrf.mxu0
    %v152 = vadd.f32 %v126, %v151
    %v153 = vpop.f32.mrf.mxu0
    %v154 = vadd.f32 %v131, %v153
    %155 = vdwg.mxu0
    %v156 = vmul.f32 %v152, 0.2
    %v157 = vmul.f32 %v154, 0.2
    %v158 = vmax.f32 %v152, %v156
    %v159 = vmax.f32 %v154, %v157
    %160 = vrot.lane.b32.xlu0 %v158, 64
    %v161 = vpop.permute.xlu0 %160
    %v162 = vsel %vm17, %v161, %v158
    %163 = vrot.lane.b32.xlu0 %v159, 64
    %v164 = vpop.permute.xlu0 %163
    %v165 = vsel %vm17, %v164, %v159
    %166 = vrot.lane.b32.xlu0 %v162, 64
    %v167 = vpop.permute.xlu0 %166
    %168 = vrot.lane.b32.xlu0 %v165, 64
    %v169 = vpop.permute.xlu0 %168
    %v170 = vsel %vm17, %v167, %v158
    %v171 = vsel %vm17, %v169, %v159
    %174 = vrot.lane.b32.xlu0 %v170, 65
    %v175 = vpop.permute.xlu0 %174
    %176 = vrot.lane.b32.xlu0 %v171, 65
    %v177 = vpop.permute.xlu0 %176
    %v180 = vsel %vm26, %v175, 0.0
    %v181 = vsel %vm26, %v177, 0.0
    %182 = vrot.lane.b32.xlu0 %v170, 127
    %v183 = vpop.permute.xlu0 %182
    %184 = vrot.lane.b32.xlu0 %v171, 127
    %v185 = vpop.permute.xlu0 %184
    %v188 = vsel %vm32, %v183, 0.0
    %v189 = vsel %vm32, %v185, 0.0
    %vm190 = vcmp.lt.s32.totalorder %v25, 62
    %191 = vrot.lane.b32.xlu0 %v170, 126
    %v192 = vpop.permute.xlu0 %191
    %193 = vrot.lane.b32.xlu0 %v171, 126
    %v194 = vpop.permute.xlu0 %193
    %v197 = vsel %vm190, %v192, 0.0
    %v198 = vsel %vm190, %v194, 0.0
    %v199 = vpack.c.bf16 %v181, %v180
    %v200 = vpack.c.bf16 %v159, %v158
    %v201 = vpack.c.bf16 %v189, %v188
    %v202 = vpack.c.bf16 %v198, %v197
    %s203 = scalar_lea.vmem %s1, 16
    %v204 = vld [vmem:[%s203] sm:$0xf]
    %v205 = vld [vmem:[%s203 + $0x4] sm:$0xf]
    %s206 = scalar_lea.vmem %s2, 32
    %v207 = vld [vmem:[%s206] sm:$0xff]
    %v208 = vld [vmem:[%s206 + $0x8] sm:$0xff]
    %210 = vset.pattern.permute.xlu0 0
    %211 = vperm.xlu0 %210, %v207
    %v212 = vpop.permute.xlu0 %211
    %215 = vset.pattern.permute.xlu0 0
    %216 = vperm.xlu0 %215, %v208
    %v217 = vpop.permute.xlu0 %216
    %v221 = vunpack.c.l.b16 %v204
    %v222 = vunpack.c.l.b16 %v205
    %v223 = vpack.c.b16 %v222, %v221
    %vm224 = vcmask 523264
    %v226 = vsel %vm224, %v223, 0
    %228 = vmatpush.bf16.msra.mxu0 0
    %229 = vmatpush.bf16.msra.mxu0 0
    %230 = vmatpush.bf16.msra.mxu0 0
    %231 = vmatpush.bf16.msra.mxu0 0
    %232 = vmatpush.bf16.msra.mxu0 %v202
    %233 = vmatpush.bf16.msra.mxu0 %v201
    %234 = vmatpush.bf16.msra.mxu0 %v200
    %235 = vmatpush.bf16.msra.mxu0 %v199
    %236 = vmatmul.bf16.gmra.mxu0 %v226
    %v237 = vpop.f32.mrf.mxu0
    %v238 = vadd.f32 %v212, %v237
    %v239 = vpop.f32.mrf.mxu0
    %v240 = vadd.f32 %v217, %v239
    %241 = vdwg.mxu0
    %v242 = vmul.f32 %v238, 0.2
    %v243 = vmul.f32 %v240, 0.2
    %v244 = vmax.f32 %v238, %v242
    %v245 = vmax.f32 %v240, %v243
    %246 = vrot.lane.b32.xlu0 %v244, 64
    %v247 = vpop.permute.xlu0 %246
    %v248 = vsel %vm17, %v247, %v244
    %249 = vrot.lane.b32.xlu0 %v245, 64
    %v250 = vpop.permute.xlu0 %249
    %v251 = vsel %vm17, %v250, %v245
    %252 = vrot.lane.b32.xlu0 %v248, 64
    %v253 = vpop.permute.xlu0 %252
    %254 = vrot.lane.b32.xlu0 %v251, 64
    %v255 = vpop.permute.xlu0 %254
    %v256 = vsel %vm17, %v253, %v244
    %v257 = vsel %vm17, %v255, %v245
    %vm258 = vcmp.ge.s32.totalorder %v25, 2
    %261 = vrot.lane.b32.xlu0 %v256, 66
    %v262 = vpop.permute.xlu0 %261
    %263 = vrot.lane.b32.xlu0 %v257, 66
    %v264 = vpop.permute.xlu0 %263
    %v267 = vsel %vm258, %v262, 0.0
    %v268 = vsel %vm258, %v264, 0.0
    %269 = vrot.lane.b32.xlu0 %v256, 126
    %v270 = vpop.permute.xlu0 %269
    %271 = vrot.lane.b32.xlu0 %v257, 126
    %v272 = vpop.permute.xlu0 %271
    %v275 = vsel %vm190, %v270, 0.0
    %v276 = vsel %vm190, %v272, 0.0
    %vm277 = vcmp.lt.s32.totalorder %v25, 60
    %278 = vrot.lane.b32.xlu0 %v256, 124
    %v279 = vpop.permute.xlu0 %278
    %280 = vrot.lane.b32.xlu0 %v257, 124
    %v281 = vpop.permute.xlu0 %280
    %v284 = vsel %vm277, %v279, 0.0
    %v285 = vsel %vm277, %v281, 0.0
    %v286 = vpack.c.bf16 %v268, %v267
    %v287 = vpack.c.bf16 %v245, %v244
    %v288 = vpack.c.bf16 %v276, %v275
    %v289 = vpack.c.bf16 %v285, %v284
    %s290 = scalar_lea.vmem %s1, 24
    %v291 = vld [vmem:[%s290] sm:$0xf]
    %v292 = vld [vmem:[%s290 + $0x4] sm:$0xf]
    %s293 = scalar_lea.vmem %s2, 48
    %v294 = vld [vmem:[%s293] sm:$0xff]
    %v295 = vld [vmem:[%s293 + $0x8] sm:$0xff]
    %297 = vset.pattern.permute.xlu0 0
    %298 = vperm.xlu0 %297, %v294
    %v299 = vpop.permute.xlu0 %298
    %302 = vset.pattern.permute.xlu0 0
    %303 = vperm.xlu0 %302, %v295
    %v304 = vpop.permute.xlu0 %303
    %v308 = vunpack.c.l.b16 %v291
    %v309 = vunpack.c.l.b16 %v292
    %v310 = vpack.c.b16 %v309, %v308
    %v312 = vsel %vm224, %v310, 0
    %314 = vmatpush.bf16.msra.mxu0 0
    %315 = vmatpush.bf16.msra.mxu0 0
    %316 = vmatpush.bf16.msra.mxu0 0
    %317 = vmatpush.bf16.msra.mxu0 0
    %318 = vmatpush.bf16.msra.mxu0 %v289
    %319 = vmatpush.bf16.msra.mxu0 %v288
    %320 = vmatpush.bf16.msra.mxu0 %v287
    %321 = vmatpush.bf16.msra.mxu0 %v286
    %322 = vmatmul.bf16.gmra.mxu0 %v312
    %v323 = vpop.f32.mrf.mxu0
    %v324 = vadd.f32 %v299, %v323
    %v325 = vpop.f32.mrf.mxu0
    %v326 = vadd.f32 %v304, %v325
    %327 = vdwg.mxu0
    %v328 = vmul.f32 %v324, 0.2
    %v329 = vmul.f32 %v326, 0.2
    %v330 = vmax.f32 %v324, %v328
    %v331 = vmax.f32 %v326, %v329
    %332 = vrot.lane.b32.xlu0 %v330, 64
    %v333 = vpop.permute.xlu0 %332
    %v334 = vsel %vm17, %v333, %v330
    %335 = vrot.lane.b32.xlu0 %v331, 64
    %v336 = vpop.permute.xlu0 %335
    %v337 = vsel %vm17, %v336, %v331
    %338 = vrot.lane.b32.xlu0 %v334, 64
    %v339 = vpop.permute.xlu0 %338
    %340 = vrot.lane.b32.xlu0 %v337, 64
    %v341 = vpop.permute.xlu0 %340
    %v342 = vsel %vm17, %v339, %v330
    %v343 = vsel %vm17, %v341, %v331
    %vm344 = vcmp.ge.s32.totalorder %v25, 4
    %347 = vrot.lane.b32.xlu0 %v342, 68
    %v348 = vpop.permute.xlu0 %347
    %349 = vrot.lane.b32.xlu0 %v343, 68
    %v350 = vpop.permute.xlu0 %349
    %v353 = vsel %vm344, %v348, 0.0
    %v354 = vsel %vm344, %v350, 0.0
    %355 = vrot.lane.b32.xlu0 %v342, 124
    %v356 = vpop.permute.xlu0 %355
    %357 = vrot.lane.b32.xlu0 %v343, 124
    %v358 = vpop.permute.xlu0 %357
    %v361 = vsel %vm277, %v356, 0.0
    %v362 = vsel %vm277, %v358, 0.0
    %vm363 = vcmp.lt.s32.totalorder %v25, 56
    %364 = vrot.lane.b32.xlu0 %v342, 120
    %v365 = vpop.permute.xlu0 %364
    %366 = vrot.lane.b32.xlu0 %v343, 120
    %v367 = vpop.permute.xlu0 %366
    %v370 = vsel %vm363, %v365, 0.0
    %v371 = vsel %vm363, %v367, 0.0
    %v372 = vpack.c.bf16 %v354, %v353
    %v373 = vpack.c.bf16 %v331, %v330
    %v374 = vpack.c.bf16 %v362, %v361
    %v375 = vpack.c.bf16 %v371, %v370
    %s376 = scalar_lea.vmem %s1, 32
    %v377 = vld [vmem:[%s376] sm:$0xf]
    %v378 = vld [vmem:[%s376 + $0x4] sm:$0xf]
    %s379 = scalar_lea.vmem %s2, 64
    %v380 = vld [vmem:[%s379] sm:$0xff]
    %v381 = vld [vmem:[%s379 + $0x8] sm:$0xff]
    %383 = vset.pattern.permute.xlu0 0
    %384 = vperm.xlu0 %383, %v380
    %v385 = vpop.permute.xlu0 %384
    %388 = vset.pattern.permute.xlu0 0
    %389 = vperm.xlu0 %388, %v381
    %v390 = vpop.permute.xlu0 %389
    %v394 = vunpack.c.l.b16 %v377
    %v395 = vunpack.c.l.b16 %v378
    %v396 = vpack.c.b16 %v395, %v394
    %v398 = vsel %vm224, %v396, 0
    %400 = vmatpush.bf16.msra.mxu0 0
    %401 = vmatpush.bf16.msra.mxu0 0
    %402 = vmatpush.bf16.msra.mxu0 0
    %403 = vmatpush.bf16.msra.mxu0 0
    %404 = vmatpush.bf16.msra.mxu0 %v375
    %405 = vmatpush.bf16.msra.mxu0 %v374
    %406 = vmatpush.bf16.msra.mxu0 %v373
    %407 = vmatpush.bf16.msra.mxu0 %v372
    %408 = vmatmul.bf16.gmra.mxu0 %v398
    %v409 = vpop.f32.mrf.mxu0
    %v410 = vadd.f32 %v385, %v409
    %v411 = vpop.f32.mrf.mxu0
    %v412 = vadd.f32 %v390, %v411
    %413 = vdwg.mxu0
    %v414 = vmul.f32 %v410, 0.2
    %v415 = vmul.f32 %v412, 0.2
    %v416 = vmax.f32 %v410, %v414
    %v417 = vmax.f32 %v412, %v415
    %418 = vrot.lane.b32.xlu0 %v416, 64
    %v419 = vpop.permute.xlu0 %418
    %v420 = vsel %vm17, %v419, %v416
    %421 = vrot.lane.b32.xlu0 %v417, 64
    %v422 = vpop.permute.xlu0 %421
    %v423 = vsel %vm17, %v422, %v417
    %424 = vrot.lane.b32.xlu0 %v420, 64
    %v425 = vpop.permute.xlu0 %424
    %426 = vrot.lane.b32.xlu0 %v423, 64
    %v427 = vpop.permute.xlu0 %426
    %v428 = vsel %vm17, %v425, %v416
    %v429 = vsel %vm17, %v427, %v417
    %vm430 = vcmp.ge.s32.totalorder %v25, 8
    %433 = vrot.lane.b32.xlu0 %v428, 72
    %v434 = vpop.permute.xlu0 %433
    %435 = vrot.lane.b32.xlu0 %v429, 72
    %v436 = vpop.permute.xlu0 %435
    %v439 = vsel %vm430, %v434, 0.0
    %v440 = vsel %vm430, %v436, 0.0
    %441 = vrot.lane.b32.xlu0 %v428, 120
    %v442 = vpop.permute.xlu0 %441
    %443 = vrot.lane.b32.xlu0 %v429, 120
    %v444 = vpop.permute.xlu0 %443
    %v447 = vsel %vm363, %v442, 0.0
    %v448 = vsel %vm363, %v444, 0.0
    %vm449 = vcmp.lt.s32.totalorder %v25, 48
    %450 = vrot.lane.b32.xlu0 %v428, 112
    %v451 = vpop.permute.xlu0 %450
    %452 = vrot.lane.b32.xlu0 %v429, 112
    %v453 = vpop.permute.xlu0 %452
    %v456 = vsel %vm449, %v451, 0.0
    %v457 = vsel %vm449, %v453, 0.0
    %v458 = vpack.c.bf16 %v440, %v439
    %v459 = vpack.c.bf16 %v417, %v416
    %v460 = vpack.c.bf16 %v448, %v447
    %v461 = vpack.c.bf16 %v457, %v456
    %s462 = scalar_lea.vmem %s1, 40
    %v463 = vld [vmem:[%s462] sm:$0xf]
    %v464 = vld [vmem:[%s462 + $0x4] sm:$0xf]
    %s465 = scalar_lea.vmem %s2, 80
    %v466 = vld [vmem:[%s465] sm:$0xff]
    %v467 = vld [vmem:[%s465 + $0x8] sm:$0xff]
    %469 = vset.pattern.permute.xlu0 0
    %470 = vperm.xlu0 %469, %v466
    %v471 = vpop.permute.xlu0 %470
    %474 = vset.pattern.permute.xlu0 0
    %475 = vperm.xlu0 %474, %v467
    %v476 = vpop.permute.xlu0 %475
    %v480 = vunpack.c.l.b16 %v463
    %v481 = vunpack.c.l.b16 %v464
    %v482 = vpack.c.b16 %v481, %v480
    %v484 = vsel %vm224, %v482, 0
    %486 = vmatpush.bf16.msra.mxu0 0
    %487 = vmatpush.bf16.msra.mxu0 0
    %488 = vmatpush.bf16.msra.mxu0 0
    %489 = vmatpush.bf16.msra.mxu0 0
    %490 = vmatpush.bf16.msra.mxu0 %v461
    %491 = vmatpush.bf16.msra.mxu0 %v460
    %492 = vmatpush.bf16.msra.mxu0 %v459
    %493 = vmatpush.bf16.msra.mxu0 %v458
    %494 = vmatmul.bf16.gmra.mxu0 %v484
    %v495 = vpop.f32.mrf.mxu0
    %v496 = vadd.f32 %v471, %v495
    %v497 = vpop.f32.mrf.mxu0
    %v498 = vadd.f32 %v476, %v497
    %499 = vdwg.mxu0
    %v500 = vmul.f32 %v496, 0.2
    %v501 = vmul.f32 %v498, 0.2
    %v502 = vmax.f32 %v496, %v500
    %v503 = vmax.f32 %v498, %v501
    %504 = vrot.lane.b32.xlu0 %v502, 64
    %v505 = vpop.permute.xlu0 %504
    %v506 = vsel %vm17, %v505, %v502
    %507 = vrot.lane.b32.xlu0 %v503, 64
    %v508 = vpop.permute.xlu0 %507
    %v509 = vsel %vm17, %v508, %v503
    %510 = vrot.lane.b32.xlu0 %v506, 64
    %v511 = vpop.permute.xlu0 %510
    %512 = vrot.lane.b32.xlu0 %v509, 64
    %v513 = vpop.permute.xlu0 %512
    %v514 = vsel %vm17, %v511, %v502
    %v515 = vsel %vm17, %v513, %v503
    %vm516 = vcmp.ge.s32.totalorder %v25, 16
    %519 = vrot.lane.b32.xlu0 %v514, 80
    %v520 = vpop.permute.xlu0 %519
    %521 = vrot.lane.b32.xlu0 %v515, 80
    %v522 = vpop.permute.xlu0 %521
    %v525 = vsel %vm516, %v520, 0.0
    %v526 = vsel %vm516, %v522, 0.0
    %527 = vrot.lane.b32.xlu0 %v514, 112
    %v528 = vpop.permute.xlu0 %527
    %529 = vrot.lane.b32.xlu0 %v515, 112
    %v530 = vpop.permute.xlu0 %529
    %v533 = vsel %vm449, %v528, 0.0
    %v534 = vsel %vm449, %v530, 0.0
    %vm535 = vcmp.lt.s32.totalorder %v25, 32
    %536 = vrot.lane.b32.xlu0 %v514, 96
    %v537 = vpop.permute.xlu0 %536
    %538 = vrot.lane.b32.xlu0 %v515, 96
    %v539 = vpop.permute.xlu0 %538
    %v542 = vsel %vm535, %v537, 0.0
    %v543 = vsel %vm535, %v539, 0.0
    %v544 = vpack.c.bf16 %v526, %v525
    %v545 = vpack.c.bf16 %v503, %v502
    %v546 = vpack.c.bf16 %v534, %v533
    %v547 = vpack.c.bf16 %v543, %v542
    %s548 = scalar_lea.vmem %s1, 48
    %v549 = vld [vmem:[%s548] sm:$0xf]
    %v550 = vld [vmem:[%s548 + $0x4] sm:$0xf]
    %s551 = scalar_lea.vmem %s2, 96
    %v552 = vld [vmem:[%s551] sm:$0xff]
    %v553 = vld [vmem:[%s551 + $0x8] sm:$0xff]
    %555 = vset.pattern.permute.xlu0 0
    %556 = vperm.xlu0 %555, %v552
    %v557 = vpop.permute.xlu0 %556
    %560 = vset.pattern.permute.xlu0 0
    %561 = vperm.xlu0 %560, %v553
    %v562 = vpop.permute.xlu0 %561
    %v566 = vunpack.c.l.b16 %v549
    %v567 = vunpack.c.l.b16 %v550
    %v568 = vpack.c.b16 %v567, %v566
    %v570 = vsel %vm224, %v568, 0
    %572 = vmatpush.bf16.msra.mxu0 0
    %573 = vmatpush.bf16.msra.mxu0 0
    %574 = vmatpush.bf16.msra.mxu0 0
    %575 = vmatpush.bf16.msra.mxu0 0
    %576 = vmatpush.bf16.msra.mxu0 %v547
    %577 = vmatpush.bf16.msra.mxu0 %v546
    %578 = vmatpush.bf16.msra.mxu0 %v545
    %579 = vmatpush.bf16.msra.mxu0 %v544
    %580 = vmatmul.bf16.gmra.mxu0 %v570
    %v581 = vpop.f32.mrf.mxu0
    %v582 = vadd.f32 %v557, %v581
    %v583 = vpop.f32.mrf.mxu0
    %v584 = vadd.f32 %v562, %v583
    %585 = vdwg.mxu0
    %v586 = vmul.f32 %v582, 0.2
    %v587 = vmul.f32 %v584, 0.2
    %v588 = vmax.f32 %v582, %v586
    %v589 = vmax.f32 %v584, %v587
    %v590 = vand.u32 %v25, 31
    %vm591 = vcmp.eq.s32.totalorder %v590, 0
    %592 = vrot.lane.b32.xlu0 %v588, 64
    %v593 = vpop.permute.xlu0 %592
    %v594 = vsel %vm17, %v593, %v588
    %595 = vrot.lane.b32.xlu0 %v589, 64
    %v596 = vpop.permute.xlu0 %595
    %v597 = vsel %vm17, %v596, %v589
    %598 = vrot.lane.b32.xlu0 %v594, 64
    %v599 = vpop.permute.xlu0 %598
    %600 = vrot.lane.b32.xlu0 %v597, 64
    %v601 = vpop.permute.xlu0 %600
    %v602 = vsel %vm17, %v599, %v588
    %v603 = vsel %vm17, %v601, %v589
    %606 = vrot.lane.b32.xlu0 %v602, 80
    %v607 = vpop.permute.xlu0 %606
    %608 = vrot.lane.b32.xlu0 %v603, 80
    %v609 = vpop.permute.xlu0 %608
    %v612 = vsel %vm591, %v588, %v607
    %v613 = vsel %vm591, %v589, %v609
    %v614 = vadd.f32 %v612, %v502
    %v615 = vadd.f32 %v613, %v503
    %616 = vrot.lane.b32.xlu0 %v614, 64
    %v617 = vpop.permute.xlu0 %616
    %v618 = vsel %vm17, %v617, %v614
    %619 = vrot.lane.b32.xlu0 %v615, 64
    %v620 = vpop.permute.xlu0 %619
    %v621 = vsel %vm17, %v620, %v615
    %622 = vrot.lane.b32.xlu0 %v618, 64
    %v623 = vpop.permute.xlu0 %622
    %624 = vrot.lane.b32.xlu0 %v621, 64
    %v625 = vpop.permute.xlu0 %624
    %v626 = vsel %vm17, %v623, %v614
    %v627 = vsel %vm17, %v625, %v615
    %630 = vrot.lane.b32.xlu0 %v626, 80
    %v631 = vpop.permute.xlu0 %630
    %632 = vrot.lane.b32.xlu0 %v627, 80
    %v633 = vpop.permute.xlu0 %632
    %v636 = vsel %vm516, %v631, 0.0
    %v637 = vsel %vm516, %v633, 0.0
    %638 = vrot.lane.b32.xlu0 %v626, 112
    %v639 = vpop.permute.xlu0 %638
    %640 = vrot.lane.b32.xlu0 %v627, 112
    %v641 = vpop.permute.xlu0 %640
    %v644 = vsel %vm449, %v639, 0.0
    %v645 = vsel %vm449, %v641, 0.0
    %v646 = vpack.c.bf16 %v637, %v636
    %v647 = vpack.c.bf16 %v615, %v614
    %v648 = vpack.c.bf16 %v645, %v644
    %s649 = scalar_lea.vmem %s1, 56
    %v650 = vld [vmem:[%s649] sm:$0xf]
    %v651 = vld [vmem:[%s649 + $0x4] sm:$0xf]
    %s652 = scalar_lea.vmem %s2, 112
    %v653 = vld [vmem:[%s652] sm:$0xff]
    %v654 = vld [vmem:[%s652 + $0x8] sm:$0xff]
    %656 = vset.pattern.permute.xlu0 0
    %657 = vperm.xlu0 %656, %v653
    %v658 = vpop.permute.xlu0 %657
    %661 = vset.pattern.permute.xlu0 0
    %662 = vperm.xlu0 %661, %v654
    %v663 = vpop.permute.xlu0 %662
    %v667 = vunpack.c.l.b16 %v650
    %v668 = vunpack.c.l.b16 %v651
    %v669 = vpack.c.b16 %v668, %v667
    %v671 = vsel %vm138, %v669, 0
    %673 = vmatpush.bf16.msra.mxu0 0
    %674 = vmatpush.bf16.msra.mxu0 0
    %675 = vmatpush.bf16.msra.mxu0 0
    %676 = vmatpush.bf16.msra.mxu0 0
    %677 = vmatpush.bf16.msra.mxu0 0
    %678 = vmatpush.bf16.msra.mxu0 %v648
    %679 = vmatpush.bf16.msra.mxu0 %v647
    %680 = vmatpush.bf16.msra.mxu0 %v646
    %681 = vmatmul.bf16.gmra.mxu0 %v671
    %v682 = vpop.f32.mrf.mxu0
    %v683 = vadd.f32 %v658, %v682
    %v684 = vpop.f32.mrf.mxu0
    %v685 = vadd.f32 %v663, %v684
    %686 = vdwg.mxu0
    %v687 = vmul.f32 %v683, 0.2
    %v688 = vmul.f32 %v685, 0.2
    %v689 = vmax.f32 %v683, %v687
    %v690 = vmax.f32 %v685, %v688
    %v691 = vand.u32 %v25, 15
    %vm692 = vcmp.eq.s32.totalorder %v691, 0
    %693 = vrot.lane.b32.xlu0 %v689, 64
    %v694 = vpop.permute.xlu0 %693
    %v695 = vsel %vm17, %v694, %v689
    %696 = vrot.lane.b32.xlu0 %v690, 64
    %v697 = vpop.permute.xlu0 %696
    %v698 = vsel %vm17, %v697, %v690
    %699 = vrot.lane.b32.xlu0 %v695, 64
    %v700 = vpop.permute.xlu0 %699
    %701 = vrot.lane.b32.xlu0 %v698, 64
    %v702 = vpop.permute.xlu0 %701
    %v703 = vsel %vm17, %v700, %v689
    %v704 = vsel %vm17, %v702, %v690
    %707 = vrot.lane.b32.xlu0 %v703, 72
    %v708 = vpop.permute.xlu0 %707
    %709 = vrot.lane.b32.xlu0 %v704, 72
    %v710 = vpop.permute.xlu0 %709
    %v713 = vsel %vm692, %v689, %v708
    %v714 = vsel %vm692, %v690, %v710
    %v715 = vadd.f32 %v713, %v416
    %v716 = vadd.f32 %v714, %v417
    %717 = vrot.lane.b32.xlu0 %v715, 64
    %v718 = vpop.permute.xlu0 %717
    %v719 = vsel %vm17, %v718, %v715
    %720 = vrot.lane.b32.xlu0 %v716, 64
    %v721 = vpop.permute.xlu0 %720
    %v722 = vsel %vm17, %v721, %v716
    %723 = vrot.lane.b32.xlu0 %v719, 64
    %v724 = vpop.permute.xlu0 %723
    %725 = vrot.lane.b32.xlu0 %v722, 64
    %v726 = vpop.permute.xlu0 %725
    %v727 = vsel %vm17, %v724, %v715
    %v728 = vsel %vm17, %v726, %v716
    %731 = vrot.lane.b32.xlu0 %v727, 72
    %v732 = vpop.permute.xlu0 %731
    %733 = vrot.lane.b32.xlu0 %v728, 72
    %v734 = vpop.permute.xlu0 %733
    %v737 = vsel %vm430, %v732, 0.0
    %v738 = vsel %vm430, %v734, 0.0
    %739 = vrot.lane.b32.xlu0 %v727, 120
    %v740 = vpop.permute.xlu0 %739
    %741 = vrot.lane.b32.xlu0 %v728, 120
    %v742 = vpop.permute.xlu0 %741
    %v745 = vsel %vm363, %v740, 0.0
    %v746 = vsel %vm363, %v742, 0.0
    %v747 = vpack.c.bf16 %v738, %v737
    %v748 = vpack.c.bf16 %v716, %v715
    %v749 = vpack.c.bf16 %v746, %v745
    %s750 = scalar_lea.vmem %s1, 64
    %v751 = vld [vmem:[%s750] sm:$0xf]
    %v752 = vld [vmem:[%s750 + $0x4] sm:$0xf]
    %s753 = scalar_lea.vmem %s2, 128
    %v754 = vld [vmem:[%s753] sm:$0xff]
    %v755 = vld [vmem:[%s753 + $0x8] sm:$0xff]
    %757 = vset.pattern.permute.xlu0 0
    %758 = vperm.xlu0 %757, %v754
    %v759 = vpop.permute.xlu0 %758
    %762 = vset.pattern.permute.xlu0 0
    %763 = vperm.xlu0 %762, %v755
    %v764 = vpop.permute.xlu0 %763
    %v768 = vunpack.c.l.b16 %v751
    %v769 = vunpack.c.l.b16 %v752
    %v770 = vpack.c.b16 %v769, %v768
    %v772 = vsel %vm138, %v770, 0
    %774 = vmatpush.bf16.msra.mxu0 0
    %775 = vmatpush.bf16.msra.mxu0 0
    %776 = vmatpush.bf16.msra.mxu0 0
    %777 = vmatpush.bf16.msra.mxu0 0
    %778 = vmatpush.bf16.msra.mxu0 0
    %779 = vmatpush.bf16.msra.mxu0 %v749
    %780 = vmatpush.bf16.msra.mxu0 %v748
    %781 = vmatpush.bf16.msra.mxu0 %v747
    %782 = vmatmul.bf16.gmra.mxu0 %v772
    %v783 = vpop.f32.mrf.mxu0
    %v784 = vadd.f32 %v759, %v783
    %v785 = vpop.f32.mrf.mxu0
    %v786 = vadd.f32 %v764, %v785
    %787 = vdwg.mxu0
    %v788 = vmul.f32 %v784, 0.2
    %v789 = vmul.f32 %v786, 0.2
    %v790 = vmax.f32 %v784, %v788
    %v791 = vmax.f32 %v786, %v789
    %v792 = vand.u32 %v25, 7
    %vm793 = vcmp.eq.s32.totalorder %v792, 0
    %794 = vrot.lane.b32.xlu0 %v790, 64
    %v795 = vpop.permute.xlu0 %794
    %v796 = vsel %vm17, %v795, %v790
    %797 = vrot.lane.b32.xlu0 %v791, 64
    %v798 = vpop.permute.xlu0 %797
    %v799 = vsel %vm17, %v798, %v791
    %800 = vrot.lane.b32.xlu0 %v796, 64
    %v801 = vpop.permute.xlu0 %800
    %802 = vrot.lane.b32.xlu0 %v799, 64
    %v803 = vpop.permute.xlu0 %802
    %v804 = vsel %vm17, %v801, %v790
    %v805 = vsel %vm17, %v803, %v791
    %808 = vrot.lane.b32.xlu0 %v804, 68
    %v809 = vpop.permute.xlu0 %808
    %810 = vrot.lane.b32.xlu0 %v805, 68
    %v811 = vpop.permute.xlu0 %810
    %v814 = vsel %vm793, %v790, %v809
    %v815 = vsel %vm793, %v791, %v811
    %v816 = vadd.f32 %v814, %v330
    %v817 = vadd.f32 %v815, %v331
    %818 = vrot.lane.b32.xlu0 %v816, 64
    %v819 = vpop.permute.xlu0 %818
    %v820 = vsel %vm17, %v819, %v816
    %821 = vrot.lane.b32.xlu0 %v817, 64
    %v822 = vpop.permute.xlu0 %821
    %v823 = vsel %vm17, %v822, %v817
    %824 = vrot.lane.b32.xlu0 %v820, 64
    %v825 = vpop.permute.xlu0 %824
    %826 = vrot.lane.b32.xlu0 %v823, 64
    %v827 = vpop.permute.xlu0 %826
    %v828 = vsel %vm17, %v825, %v816
    %v829 = vsel %vm17, %v827, %v817
    %832 = vrot.lane.b32.xlu0 %v828, 68
    %v833 = vpop.permute.xlu0 %832
    %834 = vrot.lane.b32.xlu0 %v829, 68
    %v835 = vpop.permute.xlu0 %834
    %v838 = vsel %vm344, %v833, 0.0
    %v839 = vsel %vm344, %v835, 0.0
    %840 = vrot.lane.b32.xlu0 %v828, 124
    %v841 = vpop.permute.xlu0 %840
    %842 = vrot.lane.b32.xlu0 %v829, 124
    %v843 = vpop.permute.xlu0 %842
    %v846 = vsel %vm277, %v841, 0.0
    %v847 = vsel %vm277, %v843, 0.0
    %v848 = vpack.c.bf16 %v839, %v838
    %v849 = vpack.c.bf16 %v817, %v816
    %v850 = vpack.c.bf16 %v847, %v846
    %s851 = scalar_lea.vmem %s1, 72
    %v852 = vld [vmem:[%s851] sm:$0xf]
    %v853 = vld [vmem:[%s851 + $0x4] sm:$0xf]
    %s854 = scalar_lea.vmem %s2, 144
    %v855 = vld [vmem:[%s854] sm:$0xff]
    %v856 = vld [vmem:[%s854 + $0x8] sm:$0xff]
    %858 = vset.pattern.permute.xlu0 0
    %859 = vperm.xlu0 %858, %v855
    %v860 = vpop.permute.xlu0 %859
    %863 = vset.pattern.permute.xlu0 0
    %864 = vperm.xlu0 %863, %v856
    %v865 = vpop.permute.xlu0 %864
    %v869 = vunpack.c.l.b16 %v852
    %v870 = vunpack.c.l.b16 %v853
    %v871 = vpack.c.b16 %v870, %v869
    %v873 = vsel %vm138, %v871, 0
    %875 = vmatpush.bf16.msra.mxu0 0
    %876 = vmatpush.bf16.msra.mxu0 0
    %877 = vmatpush.bf16.msra.mxu0 0
    %878 = vmatpush.bf16.msra.mxu0 0
    %879 = vmatpush.bf16.msra.mxu0 0
    %880 = vmatpush.bf16.msra.mxu0 %v850
    %881 = vmatpush.bf16.msra.mxu0 %v849
    %882 = vmatpush.bf16.msra.mxu0 %v848
    %883 = vmatmul.bf16.gmra.mxu0 %v873
    %v884 = vpop.f32.mrf.mxu0
    %v885 = vadd.f32 %v860, %v884
    %v886 = vpop.f32.mrf.mxu0
    %v887 = vadd.f32 %v865, %v886
    %888 = vdwg.mxu0
    %v889 = vmul.f32 %v885, 0.2
    %v890 = vmul.f32 %v887, 0.2
    %v891 = vmax.f32 %v885, %v889
    %v892 = vmax.f32 %v887, %v890
    %v893 = vand.u32 %v25, 3
    %vm894 = vcmp.eq.s32.totalorder %v893, 0
    %895 = vrot.lane.b32.xlu0 %v891, 64
    %v896 = vpop.permute.xlu0 %895
    %v897 = vsel %vm17, %v896, %v891
    %898 = vrot.lane.b32.xlu0 %v892, 64
    %v899 = vpop.permute.xlu0 %898
    %v900 = vsel %vm17, %v899, %v892
    %901 = vrot.lane.b32.xlu0 %v897, 64
    %v902 = vpop.permute.xlu0 %901
    %903 = vrot.lane.b32.xlu0 %v900, 64
    %v904 = vpop.permute.xlu0 %903
    %v905 = vsel %vm17, %v902, %v891
    %v906 = vsel %vm17, %v904, %v892
    %909 = vrot.lane.b32.xlu0 %v905, 66
    %v910 = vpop.permute.xlu0 %909
    %911 = vrot.lane.b32.xlu0 %v906, 66
    %v912 = vpop.permute.xlu0 %911
    %v915 = vsel %vm894, %v891, %v910
    %v916 = vsel %vm894, %v892, %v912
    %v917 = vadd.f32 %v915, %v244
    %v918 = vadd.f32 %v916, %v245
    %919 = vrot.lane.b32.xlu0 %v917, 64
    %v920 = vpop.permute.xlu0 %919
    %v921 = vsel %vm17, %v920, %v917
    %922 = vrot.lane.b32.xlu0 %v918, 64
    %v923 = vpop.permute.xlu0 %922
    %v924 = vsel %vm17, %v923, %v918
    %925 = vrot.lane.b32.xlu0 %v921, 64
    %v926 = vpop.permute.xlu0 %925
    %927 = vrot.lane.b32.xlu0 %v924, 64
    %v928 = vpop.permute.xlu0 %927
    %v929 = vsel %vm17, %v926, %v917
    %v930 = vsel %vm17, %v928, %v918
    %933 = vrot.lane.b32.xlu0 %v929, 66
    %v934 = vpop.permute.xlu0 %933
    %935 = vrot.lane.b32.xlu0 %v930, 66
    %v936 = vpop.permute.xlu0 %935
    %v939 = vsel %vm258, %v934, 0.0
    %v940 = vsel %vm258, %v936, 0.0
    %941 = vrot.lane.b32.xlu0 %v929, 126
    %v942 = vpop.permute.xlu0 %941
    %943 = vrot.lane.b32.xlu0 %v930, 126
    %v944 = vpop.permute.xlu0 %943
    %v947 = vsel %vm190, %v942, 0.0
    %v948 = vsel %vm190, %v944, 0.0
    %v949 = vpack.c.bf16 %v940, %v939
    %v950 = vpack.c.bf16 %v918, %v917
    %v951 = vpack.c.bf16 %v948, %v947
    %s952 = scalar_lea.vmem %s1, 80
    %v953 = vld [vmem:[%s952] sm:$0xf]
    %v954 = vld [vmem:[%s952 + $0x4] sm:$0xf]
    %s955 = scalar_lea.vmem %s2, 160
    %v956 = vld [vmem:[%s955] sm:$0xff]
    %v957 = vld [vmem:[%s955 + $0x8] sm:$0xff]
    %959 = vset.pattern.permute.xlu0 0
    %960 = vperm.xlu0 %959, %v956
    %v961 = vpop.permute.xlu0 %960
    %964 = vset.pattern.permute.xlu0 0
    %965 = vperm.xlu0 %964, %v957
    %v966 = vpop.permute.xlu0 %965
    %v970 = vunpack.c.l.b16 %v953
    %v971 = vunpack.c.l.b16 %v954
    %v972 = vpack.c.b16 %v971, %v970
    %v974 = vsel %vm138, %v972, 0
    %976 = vmatpush.bf16.msra.mxu0 0
    %977 = vmatpush.bf16.msra.mxu0 0
    %978 = vmatpush.bf16.msra.mxu0 0
    %979 = vmatpush.bf16.msra.mxu0 0
    %980 = vmatpush.bf16.msra.mxu0 0
    %981 = vmatpush.bf16.msra.mxu0 %v951
    %982 = vmatpush.bf16.msra.mxu0 %v950
    %983 = vmatpush.bf16.msra.mxu0 %v949
    %984 = vmatmul.bf16.gmra.mxu0 %v974
    %v985 = vpop.f32.mrf.mxu0
    %v986 = vadd.f32 %v961, %v985
    %v987 = vpop.f32.mrf.mxu0
    %v988 = vadd.f32 %v966, %v987
    %989 = vdwg.mxu0
    %v990 = vmul.f32 %v986, 0.2
    %v991 = vmul.f32 %v988, 0.2
    %v992 = vmax.f32 %v986, %v990
    %v993 = vmax.f32 %v988, %v991
    %v994 = vand.u32 %v25, 1
    %vm995 = vcmp.eq.s32.totalorder %v994, 0
    %996 = vrot.lane.b32.xlu0 %v992, 64
    %v997 = vpop.permute.xlu0 %996
    %v998 = vsel %vm17, %v997, %v992
    %999 = vrot.lane.b32.xlu0 %v993, 64
    %v1000 = vpop.permute.xlu0 %999
    %v1001 = vsel %vm17, %v1000, %v993
    %1002 = vrot.lane.b32.xlu0 %v998, 64
    %v1003 = vpop.permute.xlu0 %1002
    %1004 = vrot.lane.b32.xlu0 %v1001, 64
    %v1005 = vpop.permute.xlu0 %1004
    %v1006 = vsel %vm17, %v1003, %v992
    %v1007 = vsel %vm17, %v1005, %v993
    %1010 = vrot.lane.b32.xlu0 %v1006, 65
    %v1011 = vpop.permute.xlu0 %1010
    %1012 = vrot.lane.b32.xlu0 %v1007, 65
    %v1013 = vpop.permute.xlu0 %1012
    %v1016 = vsel %vm995, %v992, %v1011
    %v1017 = vsel %vm995, %v993, %v1013
    %v1018 = vadd.f32 %v1016, %v158
    %v1019 = vadd.f32 %v1017, %v159
    %1020 = vrot.lane.b32.xlu0 %v1018, 64
    %v1021 = vpop.permute.xlu0 %1020
    %v1022 = vsel %vm17, %v1021, %v1018
    %1023 = vrot.lane.b32.xlu0 %v1019, 64
    %v1024 = vpop.permute.xlu0 %1023
    %v1025 = vsel %vm17, %v1024, %v1019
    %1026 = vrot.lane.b32.xlu0 %v1022, 64
    %v1027 = vpop.permute.xlu0 %1026
    %1028 = vrot.lane.b32.xlu0 %v1025, 64
    %v1029 = vpop.permute.xlu0 %1028
    %v1030 = vsel %vm17, %v1027, %v1018
    %v1031 = vsel %vm17, %v1029, %v1019
    %1034 = vrot.lane.b32.xlu0 %v1030, 65
    %v1035 = vpop.permute.xlu0 %1034
    %1036 = vrot.lane.b32.xlu0 %v1031, 65
    %v1037 = vpop.permute.xlu0 %1036
    %v1040 = vsel %vm26, %v1035, 0.0
    %v1041 = vsel %vm26, %v1037, 0.0
    %1042 = vrot.lane.b32.xlu0 %v1030, 127
    %v1043 = vpop.permute.xlu0 %1042
    %1044 = vrot.lane.b32.xlu0 %v1031, 127
    %v1045 = vpop.permute.xlu0 %1044
    %v1048 = vsel %vm32, %v1043, 0.0
    %v1049 = vsel %vm32, %v1045, 0.0
    %v1050 = vpack.c.bf16 %v1041, %v1040
    %v1051 = vpack.c.bf16 %v1019, %v1018
    %v1052 = vpack.c.bf16 %v1049, %v1048
    %s1053 = scalar_lea.vmem %s1, 88
    %v1054 = vld [vmem:[%s1053] sm:$0xf]
    %v1055 = vld [vmem:[%s1053 + $0x4] sm:$0xf]
    %s1056 = scalar_lea.vmem %s2, 176
    %v1057 = vld [vmem:[%s1056] sm:$0xff]
    %v1058 = vld [vmem:[%s1056 + $0x8] sm:$0xff]
    %1060 = vset.pattern.permute.xlu0 0
    %1061 = vperm.xlu0 %1060, %v1057
    %v1062 = vpop.permute.xlu0 %1061
    %1065 = vset.pattern.permute.xlu0 0
    %1066 = vperm.xlu0 %1065, %v1058
    %v1067 = vpop.permute.xlu0 %1066
    %v1071 = vunpack.c.l.b16 %v1054
    %v1072 = vunpack.c.l.b16 %v1055
    %v1073 = vpack.c.b16 %v1072, %v1071
    %v1075 = vsel %vm138, %v1073, 0
    %1077 = vmatpush.bf16.msra.mxu0 0
    %1078 = vmatpush.bf16.msra.mxu0 0
    %1079 = vmatpush.bf16.msra.mxu0 0
    %1080 = vmatpush.bf16.msra.mxu0 0
    %1081 = vmatpush.bf16.msra.mxu0 0
    %1082 = vmatpush.bf16.msra.mxu0 %v1052
    %1083 = vmatpush.bf16.msra.mxu0 %v1051
    %1084 = vmatpush.bf16.msra.mxu0 %v1050
    %1085 = vmatmul.bf16.gmra.mxu0 %v1075
    %v1086 = vpop.f32.mrf.mxu0
    %v1087 = vadd.f32 %v1062, %v1086
    %v1088 = vpop.f32.mrf.mxu0
    %v1089 = vadd.f32 %v1067, %v1088
    %1090 = vdwg.mxu0
    %v1091 = vmul.f32 %v1087, 0.2
    %v1092 = vmul.f32 %v1089, 0.2
    %v1093 = vmax.f32 %v1087, %v1091
    %v1094 = vmax.f32 %v1089, %v1092
    %1095 = vst.msk [vmem:[#allocation2] sm:$0xff] %vm224, %v1093
    %1096 = vst.msk [vmem:[#allocation2 + $0x8] sm:$0xff] %vm224, %v1094
    // Predicated region
    $region14: #{unet1d_forward.1} parent=1 // pred_check
      _
    $region15: #{unet1d_forward.1} parent=1 // pred_check_branch
      %1098 = sbr.rel (0) target = $region17
    $region16: #{unet1d_forward.1} parent=1 // pred_region
      %1100 = vsyncadd [#allocation3], 0
      %s1101 = sshll.u32 [#allocation2], 4
      %s1102 = int_to_ptr.vmem [resolvable:$true] %s1101
      %s1103 = sshll.u32 %s3, 4
      %s1104 = int_to_ptr.hbm [resolvable:$true] %s1103
      %1109 = dma.vmem_to_hbm [thread:$0]  %s1102, 256, %s1104, [#allocation3], 128, 128, 8
    $region17: #{unet1d_forward.1} parent=1 // pred_fallthru
      _
    // Predicated region
    $region18: #{unet1d_forward.1} parent=1 // pred_check
      _
    $region19: #{unet1d_forward.1} parent=1 // pred_check_branch
      %1111 = sbr.rel (0) target = $region21
    $region20: #{unet1d_forward.1} parent=1 // pred_region
      %1113 = dma.done [#allocation3], 256
    $region21: #{unet1d_forward.1} parent=1 // pred_fallthru
      _
    %1114 = vsyncpa [#allocation3], 1

</llo_original>
